<compile_context>
chip_gen: v7x
topology: tpu7x:2x2x1
jax: 0.10.0
libtpu: 0.0.40
codegen_flags: <defaults>
</compile_context>

<pallas_src>
import jax
import jax.numpy as jnp
from jax.experimental import pallas as pl
from jax.experimental.pallas import tpu as pltpu

BITS = 8  # k = 8 in the module


def _round_up(a, b):
    return ((a + b - 1) // b) * b


# ---------------------------------------------------------------------------
# Quantization init (mirrors BQuantConv1d_csr.__init__ with method='sup').
# Pure parameter setup -> plain JAX.
# ---------------------------------------------------------------------------
def bquant_init(weight_nx_nf, k=BITS):
    """weight_nx_nf: (nx, nf) HF Conv1D weight. Returns (binary u8, scale f32)."""
    w0 = weight_nx_nf.T.astype(jnp.float32)            # (nf, nx)
    n, m = w0.shape
    binary_exp = jnp.array([1 << e for e in range(7, -1, -1)], jnp.float32)  # (8,)
    scales, bins = [], []
    for _ in range(k):
        absw0 = jnp.abs(w0)
        sign = w0 > 0
        s = ((jnp.min(absw0, axis=1) + jnp.max(absw0, axis=1)) * 0.5)[:, None]  # (n,1)
        scales.append(s)
        b = jnp.where(sign, 1.0, 0.0).reshape(n, m // 8, 8)
        b = jnp.einsum("ngj,j->ng", b, binary_exp).astype(jnp.uint8)            # packed bytes
        bins.append(b)
        w0 = w0 - jnp.where(sign, s, -s)
    binary = jnp.stack(bins, axis=0)                    # (k, nf, nx//8) uint8
    scale = jnp.stack(scales, axis=0)                   # (k, nf, 1)    float32
    return binary, scale


# ---------------------------------------------------------------------------
# One-time parameter prep: repack bits for a kernel-friendly unpack and fold
# the scales into 2*scale / sum(scale) vectors.
#
# Kernel unpack rule: bit p of packed_k[i, g, r] is the sign bit of
# W^T row (p * G + g), column r  (G = nx // 8).  We repack the original
# MSB-per-column bytes into that strided grouping here (cheap, once, in XLA).
# ---------------------------------------------------------------------------
def bquant_prepare(binary_u8, scale, bias):
    k, nf, G = binary_u8.shape
    nx = G * 8
    # fully unpack original packing: bits01[i, r, c] = bit(7 - c%8) of binary[i, r, c//8]
    shifts = (7 - (jnp.arange(nx) % 8)).astype(jnp.int32)
    byte_rep = jnp.repeat(binary_u8.astype(jnp.int32), 8, axis=2)            # (k, nf, nx)
    bits01 = (byte_rep >> shifts[None, None, :]) & 1                         # (k, nf, nx)
    # regroup columns as c = p*G + g, pack bit p of the new byte g
    bits_pg = bits01.reshape(k, nf, 8, G)                                    # [i, r, p, g]
    kp = jnp.sum(bits_pg << jnp.arange(8, dtype=jnp.int32)[None, None, :, None], axis=2)
    packed_k = jnp.transpose(kp, (0, 2, 1)).astype(jnp.uint8)                # (k, G, nf)

    scale2 = (2.0 * scale[:, :, 0]).astype(jnp.float32)                      # (k, nf)
    ssum = jnp.sum(scale[:, :, 0], axis=0, keepdims=True).astype(jnp.float32)  # (1, nf)
    bias2 = bias.reshape(1, nf).astype(jnp.float32)                          # (1, nf)
    return packed_k, scale2, ssum, bias2


# ---------------------------------------------------------------------------
# Pallas kernel: one (tile_n, tile_f) output tile of  out = x @ W_q^T + bias
# Grid = (feature tiles, row tiles); the reconstructed W^T tile (nx, tile_f)
# is built once per feature tile (row tile 0) and cached in VMEM scratch.
# ---------------------------------------------------------------------------
def _bquant_kernel(x_ref, packed_ref, scale2_ref, ssum_ref, bias_ref, o_ref, w_ref):
    # x_ref:      (tile_n, nx)       f32
    # packed_ref: (k, G, tile_f)     u8   bit p of byte [i, g, r] -> W^T row p*G+g
    # scale2_ref: (k, tile_f)        f32  2 * scale per plane
    # ssum_ref:   (1, tile_f)        f32  sum of scales over planes
    # bias_ref:   (1, tile_f)        f32
    # o_ref:      (tile_n, tile_f)   f32
    # w_ref:      (nx, tile_f)       f32  VMEM scratch, reconstructed W^T tile

    @pl.when(pl.program_id(1) == 0)
    def _reconstruct():
        n_planes = packed_ref.shape[0]
        G = packed_ref.shape[1]
        tile_f = packed_ref.shape[2]
        neg_ssum = -ssum_ref[...]                                   # (1, tile_f)
        for p in range(8):                                          # static unroll (bit pos)
            acc = jnp.broadcast_to(neg_ssum, (G, tile_f))
            for i in range(n_planes):                               # static unroll (planes)
                pk = packed_ref[i].astype(jnp.int32)                # (G, tile_f)
                acc = acc + jnp.where((pk & (1 << p)) != 0,
                                      scale2_ref[pl.ds(i, 1), :], 0.0)
            w_ref[pl.ds(p * G, G), :] = acc

    # MXU-native orientation: (tile_n, nx) @ (nx, tile_f)
    o_ref[...] = (jnp.dot(x_ref[...], w_ref[...],
                          preferred_element_type=jnp.float32)
                  + bias_ref[...])


# ---------------------------------------------------------------------------
# Wrapper: tiling, padding, BlockSpecs / grid.
# ---------------------------------------------------------------------------
def bquant_conv1d_csr_forward(x, binary_u8, scale, bias, *, tile_f=256, tile_n=256):
    k, nf, G = binary_u8.shape
    nx = G * 8
    size_out = x.shape[:-1] + (nf,)

    x2 = x.reshape(-1, nx).astype(jnp.float32)                      # (N, nx)
    n_rows = x2.shape[0]

    packed_k, scale2, ssum, bias2 = bquant_prepare(binary_u8, scale, bias)

    # tile sizing: lane dim multiple of 128 (or full padded extent); sublane mult of 8
    tile_f = min(tile_f, _round_up(nf, 128))
    nf_pad = _round_up(nf, tile_f)
    tile_n = min(tile_n, _round_up(n_rows, 8))
    n_pad = _round_up(n_rows, tile_n)

    if nf_pad != nf:
        packed_k = jnp.pad(packed_k, ((0, 0), (0, 0), (0, nf_pad - nf)))
        scale2 = jnp.pad(scale2, ((0, 0), (0, nf_pad - nf)))
        ssum = jnp.pad(ssum, ((0, 0), (0, nf_pad - nf)))
        bias2 = jnp.pad(bias2, ((0, 0), (0, nf_pad - nf)))
    if n_pad != n_rows:
        x2 = jnp.pad(x2, ((0, n_pad - n_rows), (0, 0)))

    grid = (nf_pad // tile_f, n_pad // tile_n)   # feature tiles outer, row tiles inner

    cost = pl.CostEstimate(
        flops=2 * n_pad * nx * nf_pad,
        transcendentals=0,
        bytes_accessed=int(x2.size * 4 + packed_k.size + scale2.size * 4
                           + ssum.size * 4 + bias2.size * 4 + n_pad * nf_pad * 4),
    )

    out = pl.pallas_call(
        _bquant_kernel,
        out_shape=jax.ShapeDtypeStruct((n_pad, nf_pad), jnp.float32),
        grid_spec=pltpu.PrefetchScalarGridSpec(
            num_scalar_prefetch=0,
            grid=grid,
            in_specs=[
                pl.BlockSpec((tile_n, nx), lambda j, i: (i, 0)),
                pl.BlockSpec((k, G, tile_f), lambda j, i: (0, 0, j)),
                pl.BlockSpec((k, tile_f), lambda j, i: (0, j)),
                pl.BlockSpec((1, tile_f), lambda j, i: (0, j)),
                pl.BlockSpec((1, tile_f), lambda j, i: (0, j)),
            ],
            out_specs=pl.BlockSpec((tile_n, tile_f), lambda j, i: (i, j)),
            scratch_shapes=[pltpu.VMEM((nx, tile_f), jnp.float32)],
        ),
        compiler_params=pltpu.CompilerParams(
            dimension_semantics=("parallel", "arbitrary")),
        cost_estimate=cost,
    )(x2, packed_k, scale2, ssum, bias2)

    out = out[:n_rows, :nf]
    return out.reshape(size_out)


# ---------------------------------------------------------------------------
# Pure-JAX reference (dense equivalent of the CSR/LUT forward) for validation
# ---------------------------------------------------------------------------
def reference_forward(x, binary_u8, scale, bias):
    k, nf, g = binary_u8.shape
    nx = g * 8
    byte_rep = jnp.repeat(binary_u8.astype(jnp.int32), 8, axis=2)     # (k, nf, nx)
    mask = jnp.tile(jnp.array([128, 64, 32, 16, 8, 4, 2, 1], jnp.int32), g)
    signs = jnp.where((byte_rep & mask[None, None, :]) != 0, 1.0, -1.0)
    wq = jnp.sum(scale.astype(jnp.float32) * signs, axis=0)           # (nf, nx)
    x2 = x.reshape(-1, nx).astype(jnp.float32)
    out = x2 @ wq.T + bias[None, :].astype(jnp.float32)
    return out.reshape(x.shape[:-1] + (nf,))


if __name__ == "__main__":
    key = jax.random.PRNGKey(0)
    kx, kw, kb = jax.random.split(key, 3)

    batch, seq, nx, nf = 2, 8, 32, 256
    x = jax.random.normal(kx, (batch, seq, nx), jnp.float32)
    weight = 0.02 * jax.random.normal(kw, (nx, nf), jnp.float32)  # HF Conv1D weight (nx, nf)
    bias = 0.01 * jax.random.normal(kb, (nf,), jnp.float32)

    binary_u8, scale = bquant_init(weight, k=BITS)                # (8, nf, nx//8), (8, nf, 1)

    # small tiles so the demo exercises both grid axes (2 feature tiles x 2 row tiles)
    out = bquant_conv1d_csr_forward(x, binary_u8, scale, bias, tile_f=128, tile_n=8)
    out = jax.block_until_ready(out)

    ref = reference_forward(x, binary_u8, scale, bias)
    assert out.shape == (batch, seq, nf), out.shape
    assert out.dtype == jnp.float32
    err = float(jnp.max(jnp.abs(out - ref)))
    assert jnp.allclose(out, ref, rtol=1e-4, atol=1e-4), f"max abs err {err}"

    print("KERNEL_OK")
</pallas_src>

<mosaic_0001>
module attributes {stable_mosaic.version = 11 : i64} {
  func.func @_bquant_kernel(%arg0: i32, %arg1: i32, %arg2: memref<8x32xf32, #tpu.memory_space<vmem>>, %arg3: memref<8x4x128xi8, #tpu.memory_space<vmem>>, %arg4: memref<8x128xf32, #tpu.memory_space<vmem>>, %arg5: memref<1x128xf32, #tpu.memory_space<vmem>>, %arg6: memref<1x128xf32, #tpu.memory_space<vmem>>, %arg7: memref<8x128xf32, #tpu.memory_space<vmem>>, %arg8: memref<32x128xf32, #tpu.memory_space<vmem>>) attributes {dimension_semantics = [#tpu.dimension_semantics<parallel>, #tpu.dimension_semantics<arbitrary>], iteration_bounds = array<i64: 2, 2>, scalar_prefetch = 0 : i64, scratch_operands = 1 : i64, tpu.core_type = #tpu.core_type<tc>, window_params = [{transform_indices = @transform_0, window_bounds = array<i64: 8, 32>}, {transform_indices = @transform_1, window_bounds = array<i64: 8, 4, 128>}, {transform_indices = @transform_2, window_bounds = array<i64: 8, 128>}, {transform_indices = @transform_3, window_bounds = array<i64: 1, 128>}, {transform_indices = @transform_4, window_bounds = array<i64: 1, 128>}, {transform_indices = @transform_5, window_bounds = array<i64: 8, 128>}]} {
    %c0_i32 = arith.constant 0 : i32
    %0 = arith.cmpi eq, %arg1, %c0_i32 : i32
    %1 = arith.extui %0 : i1 to i32
    %c0_i32_0 = arith.constant 0 : i32
    %2 = arith.cmpi ne, %1, %c0_i32_0 : i32
    scf.if %2 {
      %c0_8 = arith.constant 0 : index
      %c0_9 = arith.constant 0 : index
      %10 = vector.load %arg5[%c0_8, %c0_9] : memref<1x128xf32, #tpu.memory_space<vmem>>, vector<1x128xf32>
      %cst_10 = arith.constant 0.000000e+00 : f32
      %11 = vector.broadcast %cst_10 : f32 to vector<1x128xf32>
      %12 = arith.subf %11, %10 : vector<1x128xf32>
      %13 = vector.shape_cast %12 : vector<1x128xf32> to vector<1x128xf32>
      %14 = vector.broadcast %13 : vector<1x128xf32> to vector<4x128xf32>
      %c0_11 = arith.constant 0 : index
      %c0_12 = arith.constant 0 : index
      %c0_13 = arith.constant 0 : index
      %15 = vector.load %arg3[%c0_11, %c0_12, %c0_13] : memref<8x4x128xi8, #tpu.memory_space<vmem>>, vector<1x4x128xi8>
      %16 = vector.shape_cast %15 : vector<1x4x128xi8> to vector<4x128xi8>
      %17 = arith.extui %16 : vector<4x128xi8> to vector<4x128xi32>
      %c1_i32 = arith.constant 1 : i32
      %18 = vector.broadcast %c1_i32 : i32 to vector<4x128xi32>
      %19 = arith.andi %17, %18 : vector<4x128xi32>
      %c0_i32_14 = arith.constant 0 : i32
      %20 = vector.broadcast %c0_i32_14 : i32 to vector<4x128xi32>
      %21 = arith.cmpi ne, %19, %20 : vector<4x128xi32>
      %c0_15 = arith.constant 0 : index
      %c0_16 = arith.constant 0 : index
      %22 = vector.load %arg4[%c0_15, %c0_16] : memref<8x128xf32, #tpu.memory_space<vmem>>, vector<1x128xf32>
      %cst_17 = arith.constant 0.000000e+00 : f32
      %23 = vector.shape_cast %22 : vector<1x128xf32> to vector<1x128xf32>
      %24 = vector.broadcast %23 : vector<1x128xf32> to vector<4x128xf32>
      %25 = vector.broadcast %cst_17 : f32 to vector<4x128xf32>
      %26 = arith.select %21, %24, %25 : vector<4x128xi1>, vector<4x128xf32>
      %27 = arith.addf %14, %26 : vector<4x128xf32>
      %c1 = arith.constant 1 : index
      %c0_18 = arith.constant 0 : index
      %c0_19 = arith.constant 0 : index
      %28 = vector.load %arg3[%c1, %c0_18, %c0_19] : memref<8x4x128xi8, #tpu.memory_space<vmem>>, vector<1x4x128xi8>
      %29 = vector.shape_cast %28 : vector<1x4x128xi8> to vector<4x128xi8>
      %30 = arith.extui %29 : vector<4x128xi8> to vector<4x128xi32>
      %c1_i32_20 = arith.constant 1 : i32
      %31 = vector.broadcast %c1_i32_20 : i32 to vector<4x128xi32>
      %32 = arith.andi %30, %31 : vector<4x128xi32>
      %c0_i32_21 = arith.constant 0 : i32
      %33 = vector.broadcast %c0_i32_21 : i32 to vector<4x128xi32>
      %34 = arith.cmpi ne, %32, %33 : vector<4x128xi32>
      %c1_22 = arith.constant 1 : index
      %c0_23 = arith.constant 0 : index
      %35 = vector.load %arg4[%c1_22, %c0_23] : memref<8x128xf32, #tpu.memory_space<vmem>>, vector<1x128xf32>
      %cst_24 = arith.constant 0.000000e+00 : f32
      %36 = vector.shape_cast %35 : vector<1x128xf32> to vector<1x128xf32>
      %37 = vector.broadcast %36 : vector<1x128xf32> to vector<4x128xf32>
      %38 = vector.broadcast %cst_24 : f32 to vector<4x128xf32>
      %39 = arith.select %34, %37, %38 : vector<4x128xi1>, vector<4x128xf32>
      %40 = arith.addf %27, %39 : vector<4x128xf32>
      %c2 = arith.constant 2 : index
      %c0_25 = arith.constant 0 : index
      %c0_26 = arith.constant 0 : index
      %41 = vector.load %arg3[%c2, %c0_25, %c0_26] : memref<8x4x128xi8, #tpu.memory_space<vmem>>, vector<1x4x128xi8>
      %42 = vector.shape_cast %41 : vector<1x4x128xi8> to vector<4x128xi8>
      %43 = arith.extui %42 : vector<4x128xi8> to vector<4x128xi32>
      %c1_i32_27 = arith.constant 1 : i32
      %44 = vector.broadcast %c1_i32_27 : i32 to vector<4x128xi32>
      %45 = arith.andi %43, %44 : vector<4x128xi32>
      %c0_i32_28 = arith.constant 0 : i32
      %46 = vector.broadcast %c0_i32_28 : i32 to vector<4x128xi32>
      %47 = arith.cmpi ne, %45, %46 : vector<4x128xi32>
      %c2_29 = arith.constant 2 : index
      %c0_30 = arith.constant 0 : index
      %48 = vector.load %arg4[%c2_29, %c0_30] : memref<8x128xf32, #tpu.memory_space<vmem>>, vector<1x128xf32>
      %cst_31 = arith.constant 0.000000e+00 : f32
      %49 = vector.shape_cast %48 : vector<1x128xf32> to vector<1x128xf32>
      %50 = vector.broadcast %49 : vector<1x128xf32> to vector<4x128xf32>
      %51 = vector.broadcast %cst_31 : f32 to vector<4x128xf32>
      %52 = arith.select %47, %50, %51 : vector<4x128xi1>, vector<4x128xf32>
      %53 = arith.addf %40, %52 : vector<4x128xf32>
      %c3 = arith.constant 3 : index
      %c0_32 = arith.constant 0 : index
      %c0_33 = arith.constant 0 : index
      %54 = vector.load %arg3[%c3, %c0_32, %c0_33] : memref<8x4x128xi8, #tpu.memory_space<vmem>>, vector<1x4x128xi8>
      %55 = vector.shape_cast %54 : vector<1x4x128xi8> to vector<4x128xi8>
      %56 = arith.extui %55 : vector<4x128xi8> to vector<4x128xi32>
      %c1_i32_34 = arith.constant 1 : i32
      %57 = vector.broadcast %c1_i32_34 : i32 to vector<4x128xi32>
      %58 = arith.andi %56, %57 : vector<4x128xi32>
      %c0_i32_35 = arith.constant 0 : i32
      %59 = vector.broadcast %c0_i32_35 : i32 to vector<4x128xi32>
      %60 = arith.cmpi ne, %58, %59 : vector<4x128xi32>
      %c3_36 = arith.constant 3 : index
      %c0_37 = arith.constant 0 : index
      %61 = vector.load %arg4[%c3_36, %c0_37] : memref<8x128xf32, #tpu.memory_space<vmem>>, vector<1x128xf32>
      %cst_38 = arith.constant 0.000000e+00 : f32
      %62 = vector.shape_cast %61 : vector<1x128xf32> to vector<1x128xf32>
      %63 = vector.broadcast %62 : vector<1x128xf32> to vector<4x128xf32>
      %64 = vector.broadcast %cst_38 : f32 to vector<4x128xf32>
      %65 = arith.select %60, %63, %64 : vector<4x128xi1>, vector<4x128xf32>
      %66 = arith.addf %53, %65 : vector<4x128xf32>
      %c4 = arith.constant 4 : index
      %c0_39 = arith.constant 0 : index
      %c0_40 = arith.constant 0 : index
      %67 = vector.load %arg3[%c4, %c0_39, %c0_40] : memref<8x4x128xi8, #tpu.memory_space<vmem>>, vector<1x4x128xi8>
      %68 = vector.shape_cast %67 : vector<1x4x128xi8> to vector<4x128xi8>
      %69 = arith.extui %68 : vector<4x128xi8> to vector<4x128xi32>
      %c1_i32_41 = arith.constant 1 : i32
      %70 = vector.broadcast %c1_i32_41 : i32 to vector<4x128xi32>
      %71 = arith.andi %69, %70 : vector<4x128xi32>
      %c0_i32_42 = arith.constant 0 : i32
      %72 = vector.broadcast %c0_i32_42 : i32 to vector<4x128xi32>
      %73 = arith.cmpi ne, %71, %72 : vector<4x128xi32>
      %c4_43 = arith.constant 4 : index
      %c0_44 = arith.constant 0 : index
      %74 = vector.load %arg4[%c4_43, %c0_44] : memref<8x128xf32, #tpu.memory_space<vmem>>, vector<1x128xf32>
      %cst_45 = arith.constant 0.000000e+00 : f32
      %75 = vector.shape_cast %74 : vector<1x128xf32> to vector<1x128xf32>
      %76 = vector.broadcast %75 : vector<1x128xf32> to vector<4x128xf32>
      %77 = vector.broadcast %cst_45 : f32 to vector<4x128xf32>
      %78 = arith.select %73, %76, %77 : vector<4x128xi1>, vector<4x128xf32>
      %79 = arith.addf %66, %78 : vector<4x128xf32>
      %c5 = arith.constant 5 : index
      %c0_46 = arith.constant 0 : index
      %c0_47 = arith.constant 0 : index
      %80 = vector.load %arg3[%c5, %c0_46, %c0_47] : memref<8x4x128xi8, #tpu.memory_space<vmem>>, vector<1x4x128xi8>
      %81 = vector.shape_cast %80 : vector<1x4x128xi8> to vector<4x128xi8>
      %82 = arith.extui %81 : vector<4x128xi8> to vector<4x128xi32>
      %c1_i32_48 = arith.constant 1 : i32
      %83 = vector.broadcast %c1_i32_48 : i32 to vector<4x128xi32>
      %84 = arith.andi %82, %83 : vector<4x128xi32>
      %c0_i32_49 = arith.constant 0 : i32
      %85 = vector.broadcast %c0_i32_49 : i32 to vector<4x128xi32>
      %86 = arith.cmpi ne, %84, %85 : vector<4x128xi32>
      %c5_50 = arith.constant 5 : index
      %c0_51 = arith.constant 0 : index
      %87 = vector.load %arg4[%c5_50, %c0_51] : memref<8x128xf32, #tpu.memory_space<vmem>>, vector<1x128xf32>
      %cst_52 = arith.constant 0.000000e+00 : f32
      %88 = vector.shape_cast %87 : vector<1x128xf32> to vector<1x128xf32>
      %89 = vector.broadcast %88 : vector<1x128xf32> to vector<4x128xf32>
      %90 = vector.broadcast %cst_52 : f32 to vector<4x128xf32>
      %91 = arith.select %86, %89, %90 : vector<4x128xi1>, vector<4x128xf32>
      %92 = arith.addf %79, %91 : vector<4x128xf32>
      %c6 = arith.constant 6 : index
      %c0_53 = arith.constant 0 : index
      %c0_54 = arith.constant 0 : index
      %93 = vector.load %arg3[%c6, %c0_53, %c0_54] : memref<8x4x128xi8, #tpu.memory_space<vmem>>, vector<1x4x128xi8>
      %94 = vector.shape_cast %93 : vector<1x4x128xi8> to vector<4x128xi8>
      %95 = arith.extui %94 : vector<4x128xi8> to vector<4x128xi32>
      %c1_i32_55 = arith.constant 1 : i32
      %96 = vector.broadcast %c1_i32_55 : i32 to vector<4x128xi32>
      %97 = arith.andi %95, %96 : vector<4x128xi32>
      %c0_i32_56 = arith.constant 0 : i32
      %98 = vector.broadcast %c0_i32_56 : i32 to vector<4x128xi32>
      %99 = arith.cmpi ne, %97, %98 : vector<4x128xi32>
      %c6_57 = arith.constant 6 : index
      %c0_58 = arith.constant 0 : index
      %100 = vector.load %arg4[%c6_57, %c0_58] : memref<8x128xf32, #tpu.memory_space<vmem>>, vector<1x128xf32>
      %cst_59 = arith.constant 0.000000e+00 : f32
      %101 = vector.shape_cast %100 : vector<1x128xf32> to vector<1x128xf32>
      %102 = vector.broadcast %101 : vector<1x128xf32> to vector<4x128xf32>
      %103 = vector.broadcast %cst_59 : f32 to vector<4x128xf32>
      %104 = arith.select %99, %102, %103 : vector<4x128xi1>, vector<4x128xf32>
      %105 = arith.addf %92, %104 : vector<4x128xf32>
      %c7 = arith.constant 7 : index
      %c0_60 = arith.constant 0 : index
      %c0_61 = arith.constant 0 : index
      %106 = vector.load %arg3[%c7, %c0_60, %c0_61] : memref<8x4x128xi8, #tpu.memory_space<vmem>>, vector<1x4x128xi8>
      %107 = vector.shape_cast %106 : vector<1x4x128xi8> to vector<4x128xi8>
      %108 = arith.extui %107 : vector<4x128xi8> to vector<4x128xi32>
      %c1_i32_62 = arith.constant 1 : i32
      %109 = vector.broadcast %c1_i32_62 : i32 to vector<4x128xi32>
      %110 = arith.andi %108, %109 : vector<4x128xi32>
      %c0_i32_63 = arith.constant 0 : i32
      %111 = vector.broadcast %c0_i32_63 : i32 to vector<4x128xi32>
      %112 = arith.cmpi ne, %110, %111 : vector<4x128xi32>
      %c7_64 = arith.constant 7 : index
      %c0_65 = arith.constant 0 : index
      %113 = vector.load %arg4[%c7_64, %c0_65] : memref<8x128xf32, #tpu.memory_space<vmem>>, vector<1x128xf32>
      %cst_66 = arith.constant 0.000000e+00 : f32
      %114 = vector.shape_cast %113 : vector<1x128xf32> to vector<1x128xf32>
      %115 = vector.broadcast %114 : vector<1x128xf32> to vector<4x128xf32>
      %116 = vector.broadcast %cst_66 : f32 to vector<4x128xf32>
      %117 = arith.select %112, %115, %116 : vector<4x128xi1>, vector<4x128xf32>
      %118 = arith.addf %105, %117 : vector<4x128xf32>
      %c0_67 = arith.constant 0 : index
      %c0_68 = arith.constant 0 : index
      %119 = vector.load %arg8[%c0_67, %c0_68] : memref<32x128xf32, #tpu.memory_space<vmem>>, vector<4x128xf32>
      tpu.vector_store %arg8[%c0_67, %c0_68], %118 {strides = array<i32>} : memref<32x128xf32, #tpu.memory_space<vmem>>, vector<4x128xf32>,
      %120 = vector.shape_cast %12 : vector<1x128xf32> to vector<1x128xf32>
      %121 = vector.broadcast %120 : vector<1x128xf32> to vector<4x128xf32>
      %c0_69 = arith.constant 0 : index
      %c0_70 = arith.constant 0 : index
      %c0_71 = arith.constant 0 : index
      %122 = vector.load %arg3[%c0_69, %c0_70, %c0_71] : memref<8x4x128xi8, #tpu.memory_space<vmem>>, vector<1x4x128xi8>
      %123 = vector.shape_cast %122 : vector<1x4x128xi8> to vector<4x128xi8>
      %124 = arith.extui %123 : vector<4x128xi8> to vector<4x128xi32>
      %c2_i32 = arith.constant 2 : i32
      %125 = vector.broadcast %c2_i32 : i32 to vector<4x128xi32>
      %126 = arith.andi %124, %125 : vector<4x128xi32>
      %c0_i32_72 = arith.constant 0 : i32
      %127 = vector.broadcast %c0_i32_72 : i32 to vector<4x128xi32>
      %128 = arith.cmpi ne, %126, %127 : vector<4x128xi32>
      %c0_73 = arith.constant 0 : index
      %c0_74 = arith.constant 0 : index
      %129 = vector.load %arg4[%c0_73, %c0_74] : memref<8x128xf32, #tpu.memory_space<vmem>>, vector<1x128xf32>
      %cst_75 = arith.constant 0.000000e+00 : f32
      %130 = vector.shape_cast %129 : vector<1x128xf32> to vector<1x128xf32>
      %131 = vector.broadcast %130 : vector<1x128xf32> to vector<4x128xf32>
      %132 = vector.broadcast %cst_75 : f32 to vector<4x128xf32>
      %133 = arith.select %128, %131, %132 : vector<4x128xi1>, vector<4x128xf32>
      %134 = arith.addf %121, %133 : vector<4x128xf32>
      %c1_76 = arith.constant 1 : index
      %c0_77 = arith.constant 0 : index
      %c0_78 = arith.constant 0 : index
      %135 = vector.load %arg3[%c1_76, %c0_77, %c0_78] : memref<8x4x128xi8, #tpu.memory_space<vmem>>, vector<1x4x128xi8>
      %136 = vector.shape_cast %135 : vector<1x4x128xi8> to vector<4x128xi8>
      %137 = arith.extui %136 : vector<4x128xi8> to vector<4x128xi32>
      %c2_i32_79 = arith.constant 2 : i32
      %138 = vector.broadcast %c2_i32_79 : i32 to vector<4x128xi32>
      %139 = arith.andi %137, %138 : vector<4x128xi32>
      %c0_i32_80 = arith.constant 0 : i32
      %140 = vector.broadcast %c0_i32_80 : i32 to vector<4x128xi32>
      %141 = arith.cmpi ne, %139, %140 : vector<4x128xi32>
      %c1_81 = arith.constant 1 : index
      %c0_82 = arith.constant 0 : index
      %142 = vector.load %arg4[%c1_81, %c0_82] : memref<8x128xf32, #tpu.memory_space<vmem>>, vector<1x128xf32>
      %cst_83 = arith.constant 0.000000e+00 : f32
      %143 = vector.shape_cast %142 : vector<1x128xf32> to vector<1x128xf32>
      %144 = vector.broadcast %143 : vector<1x128xf32> to vector<4x128xf32>
      %145 = vector.broadcast %cst_83 : f32 to vector<4x128xf32>
      %146 = arith.select %141, %144, %145 : vector<4x128xi1>, vector<4x128xf32>
      %147 = arith.addf %134, %146 : vector<4x128xf32>
      %c2_84 = arith.constant 2 : index
      %c0_85 = arith.constant 0 : index
      %c0_86 = arith.constant 0 : index
      %148 = vector.load %arg3[%c2_84, %c0_85, %c0_86] : memref<8x4x128xi8, #tpu.memory_space<vmem>>, vector<1x4x128xi8>
      %149 = vector.shape_cast %148 : vector<1x4x128xi8> to vector<4x128xi8>
      %150 = arith.extui %149 : vector<4x128xi8> to vector<4x128xi32>
      %c2_i32_87 = arith.constant 2 : i32
      %151 = vector.broadcast %c2_i32_87 : i32 to vector<4x128xi32>
      %152 = arith.andi %150, %151 : vector<4x128xi32>
      %c0_i32_88 = arith.constant 0 : i32
      %153 = vector.broadcast %c0_i32_88 : i32 to vector<4x128xi32>
      %154 = arith.cmpi ne, %152, %153 : vector<4x128xi32>
      %c2_89 = arith.constant 2 : index
      %c0_90 = arith.constant 0 : index
      %155 = vector.load %arg4[%c2_89, %c0_90] : memref<8x128xf32, #tpu.memory_space<vmem>>, vector<1x128xf32>
      %cst_91 = arith.constant 0.000000e+00 : f32
      %156 = vector.shape_cast %155 : vector<1x128xf32> to vector<1x128xf32>
      %157 = vector.broadcast %156 : vector<1x128xf32> to vector<4x128xf32>
      %158 = vector.broadcast %cst_91 : f32 to vector<4x128xf32>
      %159 = arith.select %154, %157, %158 : vector<4x128xi1>, vector<4x128xf32>
      %160 = arith.addf %147, %159 : vector<4x128xf32>
      %c3_92 = arith.constant 3 : index
      %c0_93 = arith.constant 0 : index
      %c0_94 = arith.constant 0 : index
      %161 = vector.load %arg3[%c3_92, %c0_93, %c0_94] : memref<8x4x128xi8, #tpu.memory_space<vmem>>, vector<1x4x128xi8>
      %162 = vector.shape_cast %161 : vector<1x4x128xi8> to vector<4x128xi8>
      %163 = arith.extui %162 : vector<4x128xi8> to vector<4x128xi32>
      %c2_i32_95 = arith.constant 2 : i32
      %164 = vector.broadcast %c2_i32_95 : i32 to vector<4x128xi32>
      %165 = arith.andi %163, %164 : vector<4x128xi32>
      %c0_i32_96 = arith.constant 0 : i32
      %166 = vector.broadcast %c0_i32_96 : i32 to vector<4x128xi32>
      %167 = arith.cmpi ne, %165, %166 : vector<4x128xi32>
      %c3_97 = arith.constant 3 : index
      %c0_98 = arith.constant 0 : index
      %168 = vector.load %arg4[%c3_97, %c0_98] : memref<8x128xf32, #tpu.memory_space<vmem>>, vector<1x128xf32>
      %cst_99 = arith.constant 0.000000e+00 : f32
      %169 = vector.shape_cast %168 : vector<1x128xf32> to vector<1x128xf32>
      %170 = vector.broadcast %169 : vector<1x128xf32> to vector<4x128xf32>
      %171 = vector.broadcast %cst_99 : f32 to vector<4x128xf32>
      %172 = arith.select %167, %170, %171 : vector<4x128xi1>, vector<4x128xf32>
      %173 = arith.addf %160, %172 : vector<4x128xf32>
      %c4_100 = arith.constant 4 : index
      %c0_101 = arith.constant 0 : index
      %c0_102 = arith.constant 0 : index
      %174 = vector.load %arg3[%c4_100, %c0_101, %c0_102] : memref<8x4x128xi8, #tpu.memory_space<vmem>>, vector<1x4x128xi8>
      %175 = vector.shape_cast %174 : vector<1x4x128xi8> to vector<4x128xi8>
      %176 = arith.extui %175 : vector<4x128xi8> to vector<4x128xi32>
      %c2_i32_103 = arith.constant 2 : i32
      %177 = vector.broadcast %c2_i32_103 : i32 to vector<4x128xi32>
      %178 = arith.andi %176, %177 : vector<4x128xi32>
      %c0_i32_104 = arith.constant 0 : i32
      %179 = vector.broadcast %c0_i32_104 : i32 to vector<4x128xi32>
      %180 = arith.cmpi ne, %178, %179 : vector<4x128xi32>
      %c4_105 = arith.constant 4 : index
      %c0_106 = arith.constant 0 : index
      %181 = vector.load %arg4[%c4_105, %c0_106] : memref<8x128xf32, #tpu.memory_space<vmem>>, vector<1x128xf32>
      %cst_107 = arith.constant 0.000000e+00 : f32
      %182 = vector.shape_cast %181 : vector<1x128xf32> to vector<1x128xf32>
      %183 = vector.broadcast %182 : vector<1x128xf32> to vector<4x128xf32>
      %184 = vector.broadcast %cst_107 : f32 to vector<4x128xf32>
      %185 = arith.select %180, %183, %184 : vector<4x128xi1>, vector<4x128xf32>
      %186 = arith.addf %173, %185 : vector<4x128xf32>
      %c5_108 = arith.constant 5 : index
      %c0_109 = arith.constant 0 : index
      %c0_110 = arith.constant 0 : index
      %187 = vector.load %arg3[%c5_108, %c0_109, %c0_110] : memref<8x4x128xi8, #tpu.memory_space<vmem>>, vector<1x4x128xi8>
      %188 = vector.shape_cast %187 : vector<1x4x128xi8> to vector<4x128xi8>
      %189 = arith.extui %188 : vector<4x128xi8> to vector<4x128xi32>
      %c2_i32_111 = arith.constant 2 : i32
      %190 = vector.broadcast %c2_i32_111 : i32 to vector<4x128xi32>
      %191 = arith.andi %189, %190 : vector<4x128xi32>
      %c0_i32_112 = arith.constant 0 : i32
      %192 = vector.broadcast %c0_i32_112 : i32 to vector<4x128xi32>
      %193 = arith.cmpi ne, %191, %192 : vector<4x128xi32>
      %c5_113 = arith.constant 5 : index
      %c0_114 = arith.constant 0 : index
      %194 = vector.load %arg4[%c5_113, %c0_114] : memref<8x128xf32, #tpu.memory_space<vmem>>, vector<1x128xf32>
      %cst_115 = arith.constant 0.000000e+00 : f32
      %195 = vector.shape_cast %194 : vector<1x128xf32> to vector<1x128xf32>
      %196 = vector.broadcast %195 : vector<1x128xf32> to vector<4x128xf32>
      %197 = vector.broadcast %cst_115 : f32 to vector<4x128xf32>
      %198 = arith.select %193, %196, %197 : vector<4x128xi1>, vector<4x128xf32>
      %199 = arith.addf %186, %198 : vector<4x128xf32>
      %c6_116 = arith.constant 6 : index
      %c0_117 = arith.constant 0 : index
      %c0_118 = arith.constant 0 : index
      %200 = vector.load %arg3[%c6_116, %c0_117, %c0_118] : memref<8x4x128xi8, #tpu.memory_space<vmem>>, vector<1x4x128xi8>
      %201 = vector.shape_cast %200 : vector<1x4x128xi8> to vector<4x128xi8>
      %202 = arith.extui %201 : vector<4x128xi8> to vector<4x128xi32>
      %c2_i32_119 = arith.constant 2 : i32
      %203 = vector.broadcast %c2_i32_119 : i32 to vector<4x128xi32>
      %204 = arith.andi %202, %203 : vector<4x128xi32>
      %c0_i32_120 = arith.constant 0 : i32
      %205 = vector.broadcast %c0_i32_120 : i32 to vector<4x128xi32>
      %206 = arith.cmpi ne, %204, %205 : vector<4x128xi32>
      %c6_121 = arith.constant 6 : index
      %c0_122 = arith.constant 0 : index
      %207 = vector.load %arg4[%c6_121, %c0_122] : memref<8x128xf32, #tpu.memory_space<vmem>>, vector<1x128xf32>
      %cst_123 = arith.constant 0.000000e+00 : f32
      %208 = vector.shape_cast %207 : vector<1x128xf32> to vector<1x128xf32>
      %209 = vector.broadcast %208 : vector<1x128xf32> to vector<4x128xf32>
      %210 = vector.broadcast %cst_123 : f32 to vector<4x128xf32>
      %211 = arith.select %206, %209, %210 : vector<4x128xi1>, vector<4x128xf32>
      %212 = arith.addf %199, %211 : vector<4x128xf32>
      %c7_124 = arith.constant 7 : index
      %c0_125 = arith.constant 0 : index
      %c0_126 = arith.constant 0 : index
      %213 = vector.load %arg3[%c7_124, %c0_125, %c0_126] : memref<8x4x128xi8, #tpu.memory_space<vmem>>, vector<1x4x128xi8>
      %214 = vector.shape_cast %213 : vector<1x4x128xi8> to vector<4x128xi8>
      %215 = arith.extui %214 : vector<4x128xi8> to vector<4x128xi32>
      %c2_i32_127 = arith.constant 2 : i32
      %216 = vector.broadcast %c2_i32_127 : i32 to vector<4x128xi32>
      %217 = arith.andi %215, %216 : vector<4x128xi32>
      %c0_i32_128 = arith.constant 0 : i32
      %218 = vector.broadcast %c0_i32_128 : i32 to vector<4x128xi32>
      %219 = arith.cmpi ne, %217, %218 : vector<4x128xi32>
      %c7_129 = arith.constant 7 : index
      %c0_130 = arith.constant 0 : index
      %220 = vector.load %arg4[%c7_129, %c0_130] : memref<8x128xf32, #tpu.memory_space<vmem>>, vector<1x128xf32>
      %cst_131 = arith.constant 0.000000e+00 : f32
      %221 = vector.shape_cast %220 : vector<1x128xf32> to vector<1x128xf32>
      %222 = vector.broadcast %221 : vector<1x128xf32> to vector<4x128xf32>
      %223 = vector.broadcast %cst_131 : f32 to vector<4x128xf32>
      %224 = arith.select %219, %222, %223 : vector<4x128xi1>, vector<4x128xf32>
      %225 = arith.addf %212, %224 : vector<4x128xf32>
      %c4_132 = arith.constant 4 : index
      %c0_133 = arith.constant 0 : index
      %226 = vector.load %arg8[%c4_132, %c0_133] : memref<32x128xf32, #tpu.memory_space<vmem>>, vector<4x128xf32>
      tpu.vector_store %arg8[%c4_132, %c0_133], %225 {strides = array<i32>} : memref<32x128xf32, #tpu.memory_space<vmem>>, vector<4x128xf32>,
      %227 = vector.shape_cast %12 : vector<1x128xf32> to vector<1x128xf32>
      %228 = vector.broadcast %227 : vector<1x128xf32> to vector<4x128xf32>
      %c0_134 = arith.constant 0 : index
      %c0_135 = arith.constant 0 : index
      %c0_136 = arith.constant 0 : index
      %229 = vector.load %arg3[%c0_134, %c0_135, %c0_136] : memref<8x4x128xi8, #tpu.memory_space<vmem>>, vector<1x4x128xi8>
      %230 = vector.shape_cast %229 : vector<1x4x128xi8> to vector<4x128xi8>
      %231 = arith.extui %230 : vector<4x128xi8> to vector<4x128xi32>
      %c4_i32 = arith.constant 4 : i32
      %232 = vector.broadcast %c4_i32 : i32 to vector<4x128xi32>
      %233 = arith.andi %231, %232 : vector<4x128xi32>
      %c0_i32_137 = arith.constant 0 : i32
      %234 = vector.broadcast %c0_i32_137 : i32 to vector<4x128xi32>
      %235 = arith.cmpi ne, %233, %234 : vector<4x128xi32>
      %c0_138 = arith.constant 0 : index
      %c0_139 = arith.constant 0 : index
      %236 = vector.load %arg4[%c0_138, %c0_139] : memref<8x128xf32, #tpu.memory_space<vmem>>, vector<1x128xf32>
      %cst_140 = arith.constant 0.000000e+00 : f32
      %237 = vector.shape_cast %236 : vector<1x128xf32> to vector<1x128xf32>
      %238 = vector.broadcast %237 : vector<1x128xf32> to vector<4x128xf32>
      %239 = vector.broadcast %cst_140 : f32 to vector<4x128xf32>
      %240 = arith.select %235, %238, %239 : vector<4x128xi1>, vector<4x128xf32>
      %241 = arith.addf %228, %240 : vector<4x128xf32>
      %c1_141 = arith.constant 1 : index
      %c0_142 = arith.constant 0 : index
      %c0_143 = arith.constant 0 : index
      %242 = vector.load %arg3[%c1_141, %c0_142, %c0_143] : memref<8x4x128xi8, #tpu.memory_space<vmem>>, vector<1x4x128xi8>
      %243 = vector.shape_cast %242 : vector<1x4x128xi8> to vector<4x128xi8>
      %244 = arith.extui %243 : vector<4x128xi8> to vector<4x128xi32>
      %c4_i32_144 = arith.constant 4 : i32
      %245 = vector.broadcast %c4_i32_144 : i32 to vector<4x128xi32>
      %246 = arith.andi %244, %245 : vector<4x128xi32>
      %c0_i32_145 = arith.constant 0 : i32
      %247 = vector.broadcast %c0_i32_145 : i32 to vector<4x128xi32>
      %248 = arith.cmpi ne, %246, %247 : vector<4x128xi32>
      %c1_146 = arith.constant 1 : index
      %c0_147 = arith.constant 0 : index
      %249 = vector.load %arg4[%c1_146, %c0_147] : memref<8x128xf32, #tpu.memory_space<vmem>>, vector<1x128xf32>
      %cst_148 = arith.constant 0.000000e+00 : f32
      %250 = vector.shape_cast %249 : vector<1x128xf32> to vector<1x128xf32>
      %251 = vector.broadcast %250 : vector<1x128xf32> to vector<4x128xf32>
      %252 = vector.broadcast %cst_148 : f32 to vector<4x128xf32>
      %253 = arith.select %248, %251, %252 : vector<4x128xi1>, vector<4x128xf32>
      %254 = arith.addf %241, %253 : vector<4x128xf32>
      %c2_149 = arith.constant 2 : index
      %c0_150 = arith.constant 0 : index
      %c0_151 = arith.constant 0 : index
      %255 = vector.load %arg3[%c2_149, %c0_150, %c0_151] : memref<8x4x128xi8, #tpu.memory_space<vmem>>, vector<1x4x128xi8>
      %256 = vector.shape_cast %255 : vector<1x4x128xi8> to vector<4x128xi8>
      %257 = arith.extui %256 : vector<4x128xi8> to vector<4x128xi32>
      %c4_i32_152 = arith.constant 4 : i32
      %258 = vector.broadcast %c4_i32_152 : i32 to vector<4x128xi32>
      %259 = arith.andi %257, %258 : vector<4x128xi32>
      %c0_i32_153 = arith.constant 0 : i32
      %260 = vector.broadcast %c0_i32_153 : i32 to vector<4x128xi32>
      %261 = arith.cmpi ne, %259, %260 : vector<4x128xi32>
      %c2_154 = arith.constant 2 : index
      %c0_155 = arith.constant 0 : index
      %262 = vector.load %arg4[%c2_154, %c0_155] : memref<8x128xf32, #tpu.memory_space<vmem>>, vector<1x128xf32>
      %cst_156 = arith.constant 0.000000e+00 : f32
      %263 = vector.shape_cast %262 : vector<1x128xf32> to vector<1x128xf32>
      %264 = vector.broadcast %263 : vector<1x128xf32> to vector<4x128xf32>
      %265 = vector.broadcast %cst_156 : f32 to vector<4x128xf32>
      %266 = arith.select %261, %264, %265 : vector<4x128xi1>, vector<4x128xf32>
      %267 = arith.addf %254, %266 : vector<4x128xf32>
      %c3_157 = arith.constant 3 : index
      %c0_158 = arith.constant 0 : index
      %c0_159 = arith.constant 0 : index
      %268 = vector.load %arg3[%c3_157, %c0_158, %c0_159] : memref<8x4x128xi8, #tpu.memory_space<vmem>>, vector<1x4x128xi8>
      %269 = vector.shape_cast %268 : vector<1x4x128xi8> to vector<4x128xi8>
      %270 = arith.extui %269 : vector<4x128xi8> to vector<4x128xi32>
      %c4_i32_160 = arith.constant 4 : i32
      %271 = vector.broadcast %c4_i32_160 : i32 to vector<4x128xi32>
      %272 = arith.andi %270, %271 : vector<4x128xi32>
      %c0_i32_161 = arith.constant 0 : i32
      %273 = vector.broadcast %c0_i32_161 : i32 to vector<4x128xi32>
      %274 = arith.cmpi ne, %272, %273 : vector<4x128xi32>
      %c3_162 = arith.constant 3 : index
      %c0_163 = arith.constant 0 : index
      %275 = vector.load %arg4[%c3_162, %c0_163] : memref<8x128xf32, #tpu.memory_space<vmem>>, vector<1x128xf32>
      %cst_164 = arith.constant 0.000000e+00 : f32
      %276 = vector.shape_cast %275 : vector<1x128xf32> to vector<1x128xf32>
      %277 = vector.broadcast %276 : vector<1x128xf32> to vector<4x128xf32>
      %278 = vector.broadcast %cst_164 : f32 to vector<4x128xf32>
      %279 = arith.select %274, %277, %278 : vector<4x128xi1>, vector<4x128xf32>
      %280 = arith.addf %267, %279 : vector<4x128xf32>
      %c4_165 = arith.constant 4 : index
      %c0_166 = arith.constant 0 : index
      %c0_167 = arith.constant 0 : index
      %281 = vector.load %arg3[%c4_165, %c0_166, %c0_167] : memref<8x4x128xi8, #tpu.memory_space<vmem>>, vector<1x4x128xi8>
      %282 = vector.shape_cast %281 : vector<1x4x128xi8> to vector<4x128xi8>
      %283 = arith.extui %282 : vector<4x128xi8> to vector<4x128xi32>
      %c4_i32_168 = arith.constant 4 : i32
      %284 = vector.broadcast %c4_i32_168 : i32 to vector<4x128xi32>
      %285 = arith.andi %283, %284 : vector<4x128xi32>
      %c0_i32_169 = arith.constant 0 : i32
      %286 = vector.broadcast %c0_i32_169 : i32 to vector<4x128xi32>
      %287 = arith.cmpi ne, %285, %286 : vector<4x128xi32>
      %c4_170 = arith.constant 4 : index
      %c0_171 = arith.constant 0 : index
      %288 = vector.load %arg4[%c4_170, %c0_171] : memref<8x128xf32, #tpu.memory_space<vmem>>, vector<1x128xf32>
      %cst_172 = arith.constant 0.000000e+00 : f32
      %289 = vector.shape_cast %288 : vector<1x128xf32> to vector<1x128xf32>
      %290 = vector.broadcast %289 : vector<1x128xf32> to vector<4x128xf32>
      %291 = vector.broadcast %cst_172 : f32 to vector<4x128xf32>
      %292 = arith.select %287, %290, %291 : vector<4x128xi1>, vector<4x128xf32>
      %293 = arith.addf %280, %292 : vector<4x128xf32>
      %c5_173 = arith.constant 5 : index
      %c0_174 = arith.constant 0 : index
      %c0_175 = arith.constant 0 : index
      %294 = vector.load %arg3[%c5_173, %c0_174, %c0_175] : memref<8x4x128xi8, #tpu.memory_space<vmem>>, vector<1x4x128xi8>
      %295 = vector.shape_cast %294 : vector<1x4x128xi8> to vector<4x128xi8>
      %296 = arith.extui %295 : vector<4x128xi8> to vector<4x128xi32>
      %c4_i32_176 = arith.constant 4 : i32
      %297 = vector.broadcast %c4_i32_176 : i32 to vector<4x128xi32>
      %298 = arith.andi %296, %297 : vector<4x128xi32>
      %c0_i32_177 = arith.constant 0 : i32
      %299 = vector.broadcast %c0_i32_177 : i32 to vector<4x128xi32>
      %300 = arith.cmpi ne, %298, %299 : vector<4x128xi32>
      %c5_178 = arith.constant 5 : index
      %c0_179 = arith.constant 0 : index
      %301 = vector.load %arg4[%c5_178, %c0_179] : memref<8x128xf32, #tpu.memory_space<vmem>>, vector<1x128xf32>
      %cst_180 = arith.constant 0.000000e+00 : f32
      %302 = vector.shape_cast %301 : vector<1x128xf32> to vector<1x128xf32>
      %303 = vector.broadcast %302 : vector<1x128xf32> to vector<4x128xf32>
      %304 = vector.broadcast %cst_180 : f32 to vector<4x128xf32>
      %305 = arith.select %300, %303, %304 : vector<4x128xi1>, vector<4x128xf32>
      %306 = arith.addf %293, %305 : vector<4x128xf32>
      %c6_181 = arith.constant 6 : index
      %c0_182 = arith.constant 0 : index
      %c0_183 = arith.constant 0 : index
      %307 = vector.load %arg3[%c6_181, %c0_182, %c0_183] : memref<8x4x128xi8, #tpu.memory_space<vmem>>, vector<1x4x128xi8>
      %308 = vector.shape_cast %307 : vector<1x4x128xi8> to vector<4x128xi8>
      %309 = arith.extui %308 : vector<4x128xi8> to vector<4x128xi32>
      %c4_i32_184 = arith.constant 4 : i32
      %310 = vector.broadcast %c4_i32_184 : i32 to vector<4x128xi32>
      %311 = arith.andi %309, %310 : vector<4x128xi32>
      %c0_i32_185 = arith.constant 0 : i32
      %312 = vector.broadcast %c0_i32_185 : i32 to vector<4x128xi32>
      %313 = arith.cmpi ne, %311, %312 : vector<4x128xi32>
      %c6_186 = arith.constant 6 : index
      %c0_187 = arith.constant 0 : index
      %314 = vector.load %arg4[%c6_186, %c0_187] : memref<8x128xf32, #tpu.memory_space<vmem>>, vector<1x128xf32>
      %cst_188 = arith.constant 0.000000e+00 : f32
      %315 = vector.shape_cast %314 : vector<1x128xf32> to vector<1x128xf32>
      %316 = vector.broadcast %315 : vector<1x128xf32> to vector<4x128xf32>
      %317 = vector.broadcast %cst_188 : f32 to vector<4x128xf32>
      %318 = arith.select %313, %316, %317 : vector<4x128xi1>, vector<4x128xf32>
      %319 = arith.addf %306, %318 : vector<4x128xf32>
      %c7_189 = arith.constant 7 : index
      %c0_190 = arith.constant 0 : index
      %c0_191 = arith.constant 0 : index
      %320 = vector.load %arg3[%c7_189, %c0_190, %c0_191] : memref<8x4x128xi8, #tpu.memory_space<vmem>>, vector<1x4x128xi8>
      %321 = vector.shape_cast %320 : vector<1x4x128xi8> to vector<4x128xi8>
      %322 = arith.extui %321 : vector<4x128xi8> to vector<4x128xi32>
      %c4_i32_192 = arith.constant 4 : i32
      %323 = vector.broadcast %c4_i32_192 : i32 to vector<4x128xi32>
      %324 = arith.andi %322, %323 : vector<4x128xi32>
      %c0_i32_193 = arith.constant 0 : i32
      %325 = vector.broadcast %c0_i32_193 : i32 to vector<4x128xi32>
      %326 = arith.cmpi ne, %324, %325 : vector<4x128xi32>
      %c7_194 = arith.constant 7 : index
      %c0_195 = arith.constant 0 : index
      %327 = vector.load %arg4[%c7_194, %c0_195] : memref<8x128xf32, #tpu.memory_space<vmem>>, vector<1x128xf32>
      %cst_196 = arith.constant 0.000000e+00 : f32
      %328 = vector.shape_cast %327 : vector<1x128xf32> to vector<1x128xf32>
      %329 = vector.broadcast %328 : vector<1x128xf32> to vector<4x128xf32>
      %330 = vector.broadcast %cst_196 : f32 to vector<4x128xf32>
      %331 = arith.select %326, %329, %330 : vector<4x128xi1>, vector<4x128xf32>
      %332 = arith.addf %319, %331 : vector<4x128xf32>
      %c8 = arith.constant 8 : index
      %c0_197 = arith.constant 0 : index
      %333 = vector.load %arg8[%c8, %c0_197] : memref<32x128xf32, #tpu.memory_space<vmem>>, vector<4x128xf32>
      tpu.vector_store %arg8[%c8, %c0_197], %332 {strides = array<i32>} : memref<32x128xf32, #tpu.memory_space<vmem>>, vector<4x128xf32>,
      %334 = vector.shape_cast %12 : vector<1x128xf32> to vector<1x128xf32>
      %335 = vector.broadcast %334 : vector<1x128xf32> to vector<4x128xf32>
      %c0_198 = arith.constant 0 : index
      %c0_199 = arith.constant 0 : index
      %c0_200 = arith.constant 0 : index
      %336 = vector.load %arg3[%c0_198, %c0_199, %c0_200] : memref<8x4x128xi8, #tpu.memory_space<vmem>>, vector<1x4x128xi8>
      %337 = vector.shape_cast %336 : vector<1x4x128xi8> to vector<4x128xi8>
      %338 = arith.extui %337 : vector<4x128xi8> to vector<4x128xi32>
      %c8_i32 = arith.constant 8 : i32
      %339 = vector.broadcast %c8_i32 : i32 to vector<4x128xi32>
      %340 = arith.andi %338, %339 : vector<4x128xi32>
      %c0_i32_201 = arith.constant 0 : i32
      %341 = vector.broadcast %c0_i32_201 : i32 to vector<4x128xi32>
      %342 = arith.cmpi ne, %340, %341 : vector<4x128xi32>
      %c0_202 = arith.constant 0 : index
      %c0_203 = arith.constant 0 : index
      %343 = vector.load %arg4[%c0_202, %c0_203] : memref<8x128xf32, #tpu.memory_space<vmem>>, vector<1x128xf32>
      %cst_204 = arith.constant 0.000000e+00 : f32
      %344 = vector.shape_cast %343 : vector<1x128xf32> to vector<1x128xf32>
      %345 = vector.broadcast %344 : vector<1x128xf32> to vector<4x128xf32>
      %346 = vector.broadcast %cst_204 : f32 to vector<4x128xf32>
      %347 = arith.select %342, %345, %346 : vector<4x128xi1>, vector<4x128xf32>
      %348 = arith.addf %335, %347 : vector<4x128xf32>
      %c1_205 = arith.constant 1 : index
      %c0_206 = arith.constant 0 : index
      %c0_207 = arith.constant 0 : index
      %349 = vector.load %arg3[%c1_205, %c0_206, %c0_207] : memref<8x4x128xi8, #tpu.memory_space<vmem>>, vector<1x4x128xi8>
      %350 = vector.shape_cast %349 : vector<1x4x128xi8> to vector<4x128xi8>
      %351 = arith.extui %350 : vector<4x128xi8> to vector<4x128xi32>
      %c8_i32_208 = arith.constant 8 : i32
      %352 = vector.broadcast %c8_i32_208 : i32 to vector<4x128xi32>
      %353 = arith.andi %351, %352 : vector<4x128xi32>
      %c0_i32_209 = arith.constant 0 : i32
      %354 = vector.broadcast %c0_i32_209 : i32 to vector<4x128xi32>
      %355 = arith.cmpi ne, %353, %354 : vector<4x128xi32>
      %c1_210 = arith.constant 1 : index
      %c0_211 = arith.constant 0 : index
      %356 = vector.load %arg4[%c1_210, %c0_211] : memref<8x128xf32, #tpu.memory_space<vmem>>, vector<1x128xf32>
      %cst_212 = arith.constant 0.000000e+00 : f32
      %357 = vector.shape_cast %356 : vector<1x128xf32> to vector<1x128xf32>
      %358 = vector.broadcast %357 : vector<1x128xf32> to vector<4x128xf32>
      %359 = vector.broadcast %cst_212 : f32 to vector<4x128xf32>
      %360 = arith.select %355, %358, %359 : vector<4x128xi1>, vector<4x128xf32>
      %361 = arith.addf %348, %360 : vector<4x128xf32>
      %c2_213 = arith.constant 2 : index
      %c0_214 = arith.constant 0 : index
      %c0_215 = arith.constant 0 : index
      %362 = vector.load %arg3[%c2_213, %c0_214, %c0_215] : memref<8x4x128xi8, #tpu.memory_space<vmem>>, vector<1x4x128xi8>
      %363 = vector.shape_cast %362 : vector<1x4x128xi8> to vector<4x128xi8>
      %364 = arith.extui %363 : vector<4x128xi8> to vector<4x128xi32>
      %c8_i32_216 = arith.constant 8 : i32
      %365 = vector.broadcast %c8_i32_216 : i32 to vector<4x128xi32>
      %366 = arith.andi %364, %365 : vector<4x128xi32>
      %c0_i32_217 = arith.constant 0 : i32
      %367 = vector.broadcast %c0_i32_217 : i32 to vector<4x128xi32>
      %368 = arith.cmpi ne, %366, %367 : vector<4x128xi32>
      %c2_218 = arith.constant 2 : index
      %c0_219 = arith.constant 0 : index
      %369 = vector.load %arg4[%c2_218, %c0_219] : memref<8x128xf32, #tpu.memory_space<vmem>>, vector<1x128xf32>
      %cst_220 = arith.constant 0.000000e+00 : f32
      %370 = vector.shape_cast %369 : vector<1x128xf32> to vector<1x128xf32>
      %371 = vector.broadcast %370 : vector<1x128xf32> to vector<4x128xf32>
      %372 = vector.broadcast %cst_220 : f32 to vector<4x128xf32>
      %373 = arith.select %368, %371, %372 : vector<4x128xi1>, vector<4x128xf32>
      %374 = arith.addf %361, %373 : vector<4x128xf32>
      %c3_221 = arith.constant 3 : index
      %c0_222 = arith.constant 0 : index
      %c0_223 = arith.constant 0 : index
      %375 = vector.load %arg3[%c3_221, %c0_222, %c0_223] : memref<8x4x128xi8, #tpu.memory_space<vmem>>, vector<1x4x128xi8>
      %376 = vector.shape_cast %375 : vector<1x4x128xi8> to vector<4x128xi8>
      %377 = arith.extui %376 : vector<4x128xi8> to vector<4x128xi32>
      %c8_i32_224 = arith.constant 8 : i32
      %378 = vector.broadcast %c8_i32_224 : i32 to vector<4x128xi32>
      %379 = arith.andi %377, %378 : vector<4x128xi32>
      %c0_i32_225 = arith.constant 0 : i32
      %380 = vector.broadcast %c0_i32_225 : i32 to vector<4x128xi32>
      %381 = arith.cmpi ne, %379, %380 : vector<4x128xi32>
      %c3_226 = arith.constant 3 : index
      %c0_227 = arith.constant 0 : index
      %382 = vector.load %arg4[%c3_226, %c0_227] : memref<8x128xf32, #tpu.memory_space<vmem>>, vector<1x128xf32>
      %cst_228 = arith.constant 0.000000e+00 : f32
      %383 = vector.shape_cast %382 : vector<1x128xf32> to vector<1x128xf32>
      %384 = vector.broadcast %383 : vector<1x128xf32> to vector<4x128xf32>
      %385 = vector.broadcast %cst_228 : f32 to vector<4x128xf32>
      %386 = arith.select %381, %384, %385 : vector<4x128xi1>, vector<4x128xf32>
      %387 = arith.addf %374, %386 : vector<4x128xf32>
      %c4_229 = arith.constant 4 : index
      %c0_230 = arith.constant 0 : index
      %c0_231 = arith.constant 0 : index
      %388 = vector.load %arg3[%c4_229, %c0_230, %c0_231] : memref<8x4x128xi8, #tpu.memory_space<vmem>>, vector<1x4x128xi8>
      %389 = vector.shape_cast %388 : vector<1x4x128xi8> to vector<4x128xi8>
      %390 = arith.extui %389 : vector<4x128xi8> to vector<4x128xi32>
      %c8_i32_232 = arith.constant 8 : i32
      %391 = vector.broadcast %c8_i32_232 : i32 to vector<4x128xi32>
      %392 = arith.andi %390, %391 : vector<4x128xi32>
      %c0_i32_233 = arith.constant 0 : i32
      %393 = vector.broadcast %c0_i32_233 : i32 to vector<4x128xi32>
      %394 = arith.cmpi ne, %392, %393 : vector<4x128xi32>
      %c4_234 = arith.constant 4 : index
      %c0_235 = arith.constant 0 : index
      %395 = vector.load %arg4[%c4_234, %c0_235] : memref<8x128xf32, #tpu.memory_space<vmem>>, vector<1x128xf32>
      %cst_236 = arith.constant 0.000000e+00 : f32
      %396 = vector.shape_cast %395 : vector<1x128xf32> to vector<1x128xf32>
      %397 = vector.broadcast %396 : vector<1x128xf32> to vector<4x128xf32>
      %398 = vector.broadcast %cst_236 : f32 to vector<4x128xf32>
      %399 = arith.select %394, %397, %398 : vector<4x128xi1>, vector<4x128xf32>
      %400 = arith.addf %387, %399 : vector<4x128xf32>
      %c5_237 = arith.constant 5 : index
      %c0_238 = arith.constant 0 : index
      %c0_239 = arith.constant 0 : index
      %401 = vector.load %arg3[%c5_237, %c0_238, %c0_239] : memref<8x4x128xi8, #tpu.memory_space<vmem>>, vector<1x4x128xi8>
      %402 = vector.shape_cast %401 : vector<1x4x128xi8> to vector<4x128xi8>
      %403 = arith.extui %402 : vector<4x128xi8> to vector<4x128xi32>
      %c8_i32_240 = arith.constant 8 : i32
      %404 = vector.broadcast %c8_i32_240 : i32 to vector<4x128xi32>
      %405 = arith.andi %403, %404 : vector<4x128xi32>
      %c0_i32_241 = arith.constant 0 : i32
      %406 = vector.broadcast %c0_i32_241 : i32 to vector<4x128xi32>
      %407 = arith.cmpi ne, %405, %406 : vector<4x128xi32>
      %c5_242 = arith.constant 5 : index
      %c0_243 = arith.constant 0 : index
      %408 = vector.load %arg4[%c5_242, %c0_243] : memref<8x128xf32, #tpu.memory_space<vmem>>, vector<1x128xf32>
      %cst_244 = arith.constant 0.000000e+00 : f32
      %409 = vector.shape_cast %408 : vector<1x128xf32> to vector<1x128xf32>
      %410 = vector.broadcast %409 : vector<1x128xf32> to vector<4x128xf32>
      %411 = vector.broadcast %cst_244 : f32 to vector<4x128xf32>
      %412 = arith.select %407, %410, %411 : vector<4x128xi1>, vector<4x128xf32>
      %413 = arith.addf %400, %412 : vector<4x128xf32>
      %c6_245 = arith.constant 6 : index
      %c0_246 = arith.constant 0 : index
      %c0_247 = arith.constant 0 : index
      %414 = vector.load %arg3[%c6_245, %c0_246, %c0_247] : memref<8x4x128xi8, #tpu.memory_space<vmem>>, vector<1x4x128xi8>
      %415 = vector.shape_cast %414 : vector<1x4x128xi8> to vector<4x128xi8>
      %416 = arith.extui %415 : vector<4x128xi8> to vector<4x128xi32>
      %c8_i32_248 = arith.constant 8 : i32
      %417 = vector.broadcast %c8_i32_248 : i32 to vector<4x128xi32>
      %418 = arith.andi %416, %417 : vector<4x128xi32>
      %c0_i32_249 = arith.constant 0 : i32
      %419 = vector.broadcast %c0_i32_249 : i32 to vector<4x128xi32>
      %420 = arith.cmpi ne, %418, %419 : vector<4x128xi32>
      %c6_250 = arith.constant 6 : index
      %c0_251 = arith.constant 0 : index
      %421 = vector.load %arg4[%c6_250, %c0_251] : memref<8x128xf32, #tpu.memory_space<vmem>>, vector<1x128xf32>
      %cst_252 = arith.constant 0.000000e+00 : f32
      %422 = vector.shape_cast %421 : vector<1x128xf32> to vector<1x128xf32>
      %423 = vector.broadcast %422 : vector<1x128xf32> to vector<4x128xf32>
      %424 = vector.broadcast %cst_252 : f32 to vector<4x128xf32>
      %425 = arith.select %420, %423, %424 : vector<4x128xi1>, vector<4x128xf32>
      %426 = arith.addf %413, %425 : vector<4x128xf32>
      %c7_253 = arith.constant 7 : index
      %c0_254 = arith.constant 0 : index
      %c0_255 = arith.constant 0 : index
      %427 = vector.load %arg3[%c7_253, %c0_254, %c0_255] : memref<8x4x128xi8, #tpu.memory_space<vmem>>, vector<1x4x128xi8>
      %428 = vector.shape_cast %427 : vector<1x4x128xi8> to vector<4x128xi8>
      %429 = arith.extui %428 : vector<4x128xi8> to vector<4x128xi32>
      %c8_i32_256 = arith.constant 8 : i32
      %430 = vector.broadcast %c8_i32_256 : i32 to vector<4x128xi32>
      %431 = arith.andi %429, %430 : vector<4x128xi32>
      %c0_i32_257 = arith.constant 0 : i32
      %432 = vector.broadcast %c0_i32_257 : i32 to vector<4x128xi32>
      %433 = arith.cmpi ne, %431, %432 : vector<4x128xi32>
      %c7_258 = arith.constant 7 : index
      %c0_259 = arith.constant 0 : index
      %434 = vector.load %arg4[%c7_258, %c0_259] : memref<8x128xf32, #tpu.memory_space<vmem>>, vector<1x128xf32>
      %cst_260 = arith.constant 0.000000e+00 : f32
      %435 = vector.shape_cast %434 : vector<1x128xf32> to vector<1x128xf32>
      %436 = vector.broadcast %435 : vector<1x128xf32> to vector<4x128xf32>
      %437 = vector.broadcast %cst_260 : f32 to vector<4x128xf32>
      %438 = arith.select %433, %436, %437 : vector<4x128xi1>, vector<4x128xf32>
      %439 = arith.addf %426, %438 : vector<4x128xf32>
      %c12 = arith.constant 12 : index
      %c0_261 = arith.constant 0 : index
      %440 = vector.load %arg8[%c12, %c0_261] : memref<32x128xf32, #tpu.memory_space<vmem>>, vector<4x128xf32>
      tpu.vector_store %arg8[%c12, %c0_261], %439 {strides = array<i32>} : memref<32x128xf32, #tpu.memory_space<vmem>>, vector<4x128xf32>,
      %441 = vector.shape_cast %12 : vector<1x128xf32> to vector<1x128xf32>
      %442 = vector.broadcast %441 : vector<1x128xf32> to vector<4x128xf32>
      %c0_262 = arith.constant 0 : index
      %c0_263 = arith.constant 0 : index
      %c0_264 = arith.constant 0 : index
      %443 = vector.load %arg3[%c0_262, %c0_263, %c0_264] : memref<8x4x128xi8, #tpu.memory_space<vmem>>, vector<1x4x128xi8>
      %444 = vector.shape_cast %443 : vector<1x4x128xi8> to vector<4x128xi8>
      %445 = arith.extui %444 : vector<4x128xi8> to vector<4x128xi32>
      %c16_i32 = arith.constant 16 : i32
      %446 = vector.broadcast %c16_i32 : i32 to vector<4x128xi32>
      %447 = arith.andi %445, %446 : vector<4x128xi32>
      %c0_i32_265 = arith.constant 0 : i32
      %448 = vector.broadcast %c0_i32_265 : i32 to vector<4x128xi32>
      %449 = arith.cmpi ne, %447, %448 : vector<4x128xi32>
      %c0_266 = arith.constant 0 : index
      %c0_267 = arith.constant 0 : index
      %450 = vector.load %arg4[%c0_266, %c0_267] : memref<8x128xf32, #tpu.memory_space<vmem>>, vector<1x128xf32>
      %cst_268 = arith.constant 0.000000e+00 : f32
      %451 = vector.shape_cast %450 : vector<1x128xf32> to vector<1x128xf32>
      %452 = vector.broadcast %451 : vector<1x128xf32> to vector<4x128xf32>
      %453 = vector.broadcast %cst_268 : f32 to vector<4x128xf32>
      %454 = arith.select %449, %452, %453 : vector<4x128xi1>, vector<4x128xf32>
      %455 = arith.addf %442, %454 : vector<4x128xf32>
      %c1_269 = arith.constant 1 : index
      %c0_270 = arith.constant 0 : index
      %c0_271 = arith.constant 0 : index
      %456 = vector.load %arg3[%c1_269, %c0_270, %c0_271] : memref<8x4x128xi8, #tpu.memory_space<vmem>>, vector<1x4x128xi8>
      %457 = vector.shape_cast %456 : vector<1x4x128xi8> to vector<4x128xi8>
      %458 = arith.extui %457 : vector<4x128xi8> to vector<4x128xi32>
      %c16_i32_272 = arith.constant 16 : i32
      %459 = vector.broadcast %c16_i32_272 : i32 to vector<4x128xi32>
      %460 = arith.andi %458, %459 : vector<4x128xi32>
      %c0_i32_273 = arith.constant 0 : i32
      %461 = vector.broadcast %c0_i32_273 : i32 to vector<4x128xi32>
      %462 = arith.cmpi ne, %460, %461 : vector<4x128xi32>
      %c1_274 = arith.constant 1 : index
      %c0_275 = arith.constant 0 : index
      %463 = vector.load %arg4[%c1_274, %c0_275] : memref<8x128xf32, #tpu.memory_space<vmem>>, vector<1x128xf32>
      %cst_276 = arith.constant 0.000000e+00 : f32
      %464 = vector.shape_cast %463 : vector<1x128xf32> to vector<1x128xf32>
      %465 = vector.broadcast %464 : vector<1x128xf32> to vector<4x128xf32>
      %466 = vector.broadcast %cst_276 : f32 to vector<4x128xf32>
      %467 = arith.select %462, %465, %466 : vector<4x128xi1>, vector<4x128xf32>
      %468 = arith.addf %455, %467 : vector<4x128xf32>
      %c2_277 = arith.constant 2 : index
      %c0_278 = arith.constant 0 : index
      %c0_279 = arith.constant 0 : index
      %469 = vector.load %arg3[%c2_277, %c0_278, %c0_279] : memref<8x4x128xi8, #tpu.memory_space<vmem>>, vector<1x4x128xi8>
      %470 = vector.shape_cast %469 : vector<1x4x128xi8> to vector<4x128xi8>
      %471 = arith.extui %470 : vector<4x128xi8> to vector<4x128xi32>
      %c16_i32_280 = arith.constant 16 : i32
      %472 = vector.broadcast %c16_i32_280 : i32 to vector<4x128xi32>
      %473 = arith.andi %471, %472 : vector<4x128xi32>
      %c0_i32_281 = arith.constant 0 : i32
      %474 = vector.broadcast %c0_i32_281 : i32 to vector<4x128xi32>
      %475 = arith.cmpi ne, %473, %474 : vector<4x128xi32>
      %c2_282 = arith.constant 2 : index
      %c0_283 = arith.constant 0 : index
      %476 = vector.load %arg4[%c2_282, %c0_283] : memref<8x128xf32, #tpu.memory_space<vmem>>, vector<1x128xf32>
      %cst_284 = arith.constant 0.000000e+00 : f32
      %477 = vector.shape_cast %476 : vector<1x128xf32> to vector<1x128xf32>
      %478 = vector.broadcast %477 : vector<1x128xf32> to vector<4x128xf32>
      %479 = vector.broadcast %cst_284 : f32 to vector<4x128xf32>
      %480 = arith.select %475, %478, %479 : vector<4x128xi1>, vector<4x128xf32>
      %481 = arith.addf %468, %480 : vector<4x128xf32>
      %c3_285 = arith.constant 3 : index
      %c0_286 = arith.constant 0 : index
      %c0_287 = arith.constant 0 : index
      %482 = vector.load %arg3[%c3_285, %c0_286, %c0_287] : memref<8x4x128xi8, #tpu.memory_space<vmem>>, vector<1x4x128xi8>
      %483 = vector.shape_cast %482 : vector<1x4x128xi8> to vector<4x128xi8>
      %484 = arith.extui %483 : vector<4x128xi8> to vector<4x128xi32>
      %c16_i32_288 = arith.constant 16 : i32
      %485 = vector.broadcast %c16_i32_288 : i32 to vector<4x128xi32>
      %486 = arith.andi %484, %485 : vector<4x128xi32>
      %c0_i32_289 = arith.constant 0 : i32
      %487 = vector.broadcast %c0_i32_289 : i32 to vector<4x128xi32>
      %488 = arith.cmpi ne, %486, %487 : vector<4x128xi32>
      %c3_290 = arith.constant 3 : index
      %c0_291 = arith.constant 0 : index
      %489 = vector.load %arg4[%c3_290, %c0_291] : memref<8x128xf32, #tpu.memory_space<vmem>>, vector<1x128xf32>
      %cst_292 = arith.constant 0.000000e+00 : f32
      %490 = vector.shape_cast %489 : vector<1x128xf32> to vector<1x128xf32>
      %491 = vector.broadcast %490 : vector<1x128xf32> to vector<4x128xf32>
      %492 = vector.broadcast %cst_292 : f32 to vector<4x128xf32>
      %493 = arith.select %488, %491, %492 : vector<4x128xi1>, vector<4x128xf32>
      %494 = arith.addf %481, %493 : vector<4x128xf32>
      %c4_293 = arith.constant 4 : index
      %c0_294 = arith.constant 0 : index
      %c0_295 = arith.constant 0 : index
      %495 = vector.load %arg3[%c4_293, %c0_294, %c0_295] : memref<8x4x128xi8, #tpu.memory_space<vmem>>, vector<1x4x128xi8>
      %496 = vector.shape_cast %495 : vector<1x4x128xi8> to vector<4x128xi8>
      %497 = arith.extui %496 : vector<4x128xi8> to vector<4x128xi32>
      %c16_i32_296 = arith.constant 16 : i32
      %498 = vector.broadcast %c16_i32_296 : i32 to vector<4x128xi32>
      %499 = arith.andi %497, %498 : vector<4x128xi32>
      %c0_i32_297 = arith.constant 0 : i32
      %500 = vector.broadcast %c0_i32_297 : i32 to vector<4x128xi32>
      %501 = arith.cmpi ne, %499, %500 : vector<4x128xi32>
      %c4_298 = arith.constant 4 : index
      %c0_299 = arith.constant 0 : index
      %502 = vector.load %arg4[%c4_298, %c0_299] : memref<8x128xf32, #tpu.memory_space<vmem>>, vector<1x128xf32>
      %cst_300 = arith.constant 0.000000e+00 : f32
      %503 = vector.shape_cast %502 : vector<1x128xf32> to vector<1x128xf32>
      %504 = vector.broadcast %503 : vector<1x128xf32> to vector<4x128xf32>
      %505 = vector.broadcast %cst_300 : f32 to vector<4x128xf32>
      %506 = arith.select %501, %504, %505 : vector<4x128xi1>, vector<4x128xf32>
      %507 = arith.addf %494, %506 : vector<4x128xf32>
      %c5_301 = arith.constant 5 : index
      %c0_302 = arith.constant 0 : index
      %c0_303 = arith.constant 0 : index
      %508 = vector.load %arg3[%c5_301, %c0_302, %c0_303] : memref<8x4x128xi8, #tpu.memory_space<vmem>>, vector<1x4x128xi8>
      %509 = vector.shape_cast %508 : vector<1x4x128xi8> to vector<4x128xi8>
      %510 = arith.extui %509 : vector<4x128xi8> to vector<4x128xi32>
      %c16_i32_304 = arith.constant 16 : i32
      %511 = vector.broadcast %c16_i32_304 : i32 to vector<4x128xi32>
      %512 = arith.andi %510, %511 : vector<4x128xi32>
      %c0_i32_305 = arith.constant 0 : i32
      %513 = vector.broadcast %c0_i32_305 : i32 to vector<4x128xi32>
      %514 = arith.cmpi ne, %512, %513 : vector<4x128xi32>
      %c5_306 = arith.constant 5 : index
      %c0_307 = arith.constant 0 : index
      %515 = vector.load %arg4[%c5_306, %c0_307] : memref<8x128xf32, #tpu.memory_space<vmem>>, vector<1x128xf32>
      %cst_308 = arith.constant 0.000000e+00 : f32
      %516 = vector.shape_cast %515 : vector<1x128xf32> to vector<1x128xf32>
      %517 = vector.broadcast %516 : vector<1x128xf32> to vector<4x128xf32>
      %518 = vector.broadcast %cst_308 : f32 to vector<4x128xf32>
      %519 = arith.select %514, %517, %518 : vector<4x128xi1>, vector<4x128xf32>
      %520 = arith.addf %507, %519 : vector<4x128xf32>
      %c6_309 = arith.constant 6 : index
      %c0_310 = arith.constant 0 : index
      %c0_311 = arith.constant 0 : index
      %521 = vector.load %arg3[%c6_309, %c0_310, %c0_311] : memref<8x4x128xi8, #tpu.memory_space<vmem>>, vector<1x4x128xi8>
      %522 = vector.shape_cast %521 : vector<1x4x128xi8> to vector<4x128xi8>
      %523 = arith.extui %522 : vector<4x128xi8> to vector<4x128xi32>
      %c16_i32_312 = arith.constant 16 : i32
      %524 = vector.broadcast %c16_i32_312 : i32 to vector<4x128xi32>
      %525 = arith.andi %523, %524 : vector<4x128xi32>
      %c0_i32_313 = arith.constant 0 : i32
      %526 = vector.broadcast %c0_i32_313 : i32 to vector<4x128xi32>
      %527 = arith.cmpi ne, %525, %526 : vector<4x128xi32>
      %c6_314 = arith.constant 6 : index
      %c0_315 = arith.constant 0 : index
      %528 = vector.load %arg4[%c6_314, %c0_315] : memref<8x128xf32, #tpu.memory_space<vmem>>, vector<1x128xf32>
      %cst_316 = arith.constant 0.000000e+00 : f32
      %529 = vector.shape_cast %528 : vector<1x128xf32> to vector<1x128xf32>
      %530 = vector.broadcast %529 : vector<1x128xf32> to vector<4x128xf32>
      %531 = vector.broadcast %cst_316 : f32 to vector<4x128xf32>
      %532 = arith.select %527, %530, %531 : vector<4x128xi1>, vector<4x128xf32>
      %533 = arith.addf %520, %532 : vector<4x128xf32>
      %c7_317 = arith.constant 7 : index
      %c0_318 = arith.constant 0 : index
      %c0_319 = arith.constant 0 : index
      %534 = vector.load %arg3[%c7_317, %c0_318, %c0_319] : memref<8x4x128xi8, #tpu.memory_space<vmem>>, vector<1x4x128xi8>
      %535 = vector.shape_cast %534 : vector<1x4x128xi8> to vector<4x128xi8>
      %536 = arith.extui %535 : vector<4x128xi8> to vector<4x128xi32>
      %c16_i32_320 = arith.constant 16 : i32
      %537 = vector.broadcast %c16_i32_320 : i32 to vector<4x128xi32>
      %538 = arith.andi %536, %537 : vector<4x128xi32>
      %c0_i32_321 = arith.constant 0 : i32
      %539 = vector.broadcast %c0_i32_321 : i32 to vector<4x128xi32>
      %540 = arith.cmpi ne, %538, %539 : vector<4x128xi32>
      %c7_322 = arith.constant 7 : index
      %c0_323 = arith.constant 0 : index
      %541 = vector.load %arg4[%c7_322, %c0_323] : memref<8x128xf32, #tpu.memory_space<vmem>>, vector<1x128xf32>
      %cst_324 = arith.constant 0.000000e+00 : f32
      %542 = vector.shape_cast %541 : vector<1x128xf32> to vector<1x128xf32>
      %543 = vector.broadcast %542 : vector<1x128xf32> to vector<4x128xf32>
      %544 = vector.broadcast %cst_324 : f32 to vector<4x128xf32>
      %545 = arith.select %540, %543, %544 : vector<4x128xi1>, vector<4x128xf32>
      %546 = arith.addf %533, %545 : vector<4x128xf32>
      %c16 = arith.constant 16 : index
      %c0_325 = arith.constant 0 : index
      %547 = vector.load %arg8[%c16, %c0_325] : memref<32x128xf32, #tpu.memory_space<vmem>>, vector<4x128xf32>
      tpu.vector_store %arg8[%c16, %c0_325], %546 {strides = array<i32>} : memref<32x128xf32, #tpu.memory_space<vmem>>, vector<4x128xf32>,
      %548 = vector.shape_cast %12 : vector<1x128xf32> to vector<1x128xf32>
      %549 = vector.broadcast %548 : vector<1x128xf32> to vector<4x128xf32>
      %c0_326 = arith.constant 0 : index
      %c0_327 = arith.constant 0 : index
      %c0_328 = arith.constant 0 : index
      %550 = vector.load %arg3[%c0_326, %c0_327, %c0_328] : memref<8x4x128xi8, #tpu.memory_space<vmem>>, vector<1x4x128xi8>
      %551 = vector.shape_cast %550 : vector<1x4x128xi8> to vector<4x128xi8>
      %552 = arith.extui %551 : vector<4x128xi8> to vector<4x128xi32>
      %c32_i32 = arith.constant 32 : i32
      %553 = vector.broadcast %c32_i32 : i32 to vector<4x128xi32>
      %554 = arith.andi %552, %553 : vector<4x128xi32>
      %c0_i32_329 = arith.constant 0 : i32
      %555 = vector.broadcast %c0_i32_329 : i32 to vector<4x128xi32>
      %556 = arith.cmpi ne, %554, %555 : vector<4x128xi32>
      %c0_330 = arith.constant 0 : index
      %c0_331 = arith.constant 0 : index
      %557 = vector.load %arg4[%c0_330, %c0_331] : memref<8x128xf32, #tpu.memory_space<vmem>>, vector<1x128xf32>
      %cst_332 = arith.constant 0.000000e+00 : f32
      %558 = vector.shape_cast %557 : vector<1x128xf32> to vector<1x128xf32>
      %559 = vector.broadcast %558 : vector<1x128xf32> to vector<4x128xf32>
      %560 = vector.broadcast %cst_332 : f32 to vector<4x128xf32>
      %561 = arith.select %556, %559, %560 : vector<4x128xi1>, vector<4x128xf32>
      %562 = arith.addf %549, %561 : vector<4x128xf32>
      %c1_333 = arith.constant 1 : index
      %c0_334 = arith.constant 0 : index
      %c0_335 = arith.constant 0 : index
      %563 = vector.load %arg3[%c1_333, %c0_334, %c0_335] : memref<8x4x128xi8, #tpu.memory_space<vmem>>, vector<1x4x128xi8>
      %564 = vector.shape_cast %563 : vector<1x4x128xi8> to vector<4x128xi8>
      %565 = arith.extui %564 : vector<4x128xi8> to vector<4x128xi32>
      %c32_i32_336 = arith.constant 32 : i32
      %566 = vector.broadcast %c32_i32_336 : i32 to vector<4x128xi32>
      %567 = arith.andi %565, %566 : vector<4x128xi32>
      %c0_i32_337 = arith.constant 0 : i32
      %568 = vector.broadcast %c0_i32_337 : i32 to vector<4x128xi32>
      %569 = arith.cmpi ne, %567, %568 : vector<4x128xi32>
      %c1_338 = arith.constant 1 : index
      %c0_339 = arith.constant 0 : index
      %570 = vector.load %arg4[%c1_338, %c0_339] : memref<8x128xf32, #tpu.memory_space<vmem>>, vector<1x128xf32>
      %cst_340 = arith.constant 0.000000e+00 : f32
      %571 = vector.shape_cast %570 : vector<1x128xf32> to vector<1x128xf32>
      %572 = vector.broadcast %571 : vector<1x128xf32> to vector<4x128xf32>
      %573 = vector.broadcast %cst_340 : f32 to vector<4x128xf32>
      %574 = arith.select %569, %572, %573 : vector<4x128xi1>, vector<4x128xf32>
      %575 = arith.addf %562, %574 : vector<4x128xf32>
      %c2_341 = arith.constant 2 : index
      %c0_342 = arith.constant 0 : index
      %c0_343 = arith.constant 0 : index
      %576 = vector.load %arg3[%c2_341, %c0_342, %c0_343] : memref<8x4x128xi8, #tpu.memory_space<vmem>>, vector<1x4x128xi8>
      %577 = vector.shape_cast %576 : vector<1x4x128xi8> to vector<4x128xi8>
      %578 = arith.extui %577 : vector<4x128xi8> to vector<4x128xi32>
      %c32_i32_344 = arith.constant 32 : i32
      %579 = vector.broadcast %c32_i32_344 : i32 to vector<4x128xi32>
      %580 = arith.andi %578, %579 : vector<4x128xi32>
      %c0_i32_345 = arith.constant 0 : i32
      %581 = vector.broadcast %c0_i32_345 : i32 to vector<4x128xi32>
      %582 = arith.cmpi ne, %580, %581 : vector<4x128xi32>
      %c2_346 = arith.constant 2 : index
      %c0_347 = arith.constant 0 : index
      %583 = vector.load %arg4[%c2_346, %c0_347] : memref<8x128xf32, #tpu.memory_space<vmem>>, vector<1x128xf32>
      %cst_348 = arith.constant 0.000000e+00 : f32
      %584 = vector.shape_cast %583 : vector<1x128xf32> to vector<1x128xf32>
      %585 = vector.broadcast %584 : vector<1x128xf32> to vector<4x128xf32>
      %586 = vector.broadcast %cst_348 : f32 to vector<4x128xf32>
      %587 = arith.select %582, %585, %586 : vector<4x128xi1>, vector<4x128xf32>
      %588 = arith.addf %575, %587 : vector<4x128xf32>
      %c3_349 = arith.constant 3 : index
      %c0_350 = arith.constant 0 : index
      %c0_351 = arith.constant 0 : index
      %589 = vector.load %arg3[%c3_349, %c0_350, %c0_351] : memref<8x4x128xi8, #tpu.memory_space<vmem>>, vector<1x4x128xi8>
      %590 = vector.shape_cast %589 : vector<1x4x128xi8> to vector<4x128xi8>
      %591 = arith.extui %590 : vector<4x128xi8> to vector<4x128xi32>
      %c32_i32_352 = arith.constant 32 : i32
      %592 = vector.broadcast %c32_i32_352 : i32 to vector<4x128xi32>
      %593 = arith.andi %591, %592 : vector<4x128xi32>
      %c0_i32_353 = arith.constant 0 : i32
      %594 = vector.broadcast %c0_i32_353 : i32 to vector<4x128xi32>
      %595 = arith.cmpi ne, %593, %594 : vector<4x128xi32>
      %c3_354 = arith.constant 3 : index
      %c0_355 = arith.constant 0 : index
      %596 = vector.load %arg4[%c3_354, %c0_355] : memref<8x128xf32, #tpu.memory_space<vmem>>, vector<1x128xf32>
      %cst_356 = arith.constant 0.000000e+00 : f32
      %597 = vector.shape_cast %596 : vector<1x128xf32> to vector<1x128xf32>
      %598 = vector.broadcast %597 : vector<1x128xf32> to vector<4x128xf32>
      %599 = vector.broadcast %cst_356 : f32 to vector<4x128xf32>
      %600 = arith.select %595, %598, %599 : vector<4x128xi1>, vector<4x128xf32>
      %601 = arith.addf %588, %600 : vector<4x128xf32>
      %c4_357 = arith.constant 4 : index
      %c0_358 = arith.constant 0 : index
      %c0_359 = arith.constant 0 : index
      %602 = vector.load %arg3[%c4_357, %c0_358, %c0_359] : memref<8x4x128xi8, #tpu.memory_space<vmem>>, vector<1x4x128xi8>
      %603 = vector.shape_cast %602 : vector<1x4x128xi8> to vector<4x128xi8>
      %604 = arith.extui %603 : vector<4x128xi8> to vector<4x128xi32>
      %c32_i32_360 = arith.constant 32 : i32
      %605 = vector.broadcast %c32_i32_360 : i32 to vector<4x128xi32>
      %606 = arith.andi %604, %605 : vector<4x128xi32>
      %c0_i32_361 = arith.constant 0 : i32
      %607 = vector.broadcast %c0_i32_361 : i32 to vector<4x128xi32>
      %608 = arith.cmpi ne, %606, %607 : vector<4x128xi32>
      %c4_362 = arith.constant 4 : index
      %c0_363 = arith.constant 0 : index
      %609 = vector.load %arg4[%c4_362, %c0_363] : memref<8x128xf32, #tpu.memory_space<vmem>>, vector<1x128xf32>
      %cst_364 = arith.constant 0.000000e+00 : f32
      %610 = vector.shape_cast %609 : vector<1x128xf32> to vector<1x128xf32>
      %611 = vector.broadcast %610 : vector<1x128xf32> to vector<4x128xf32>
      %612 = vector.broadcast %cst_364 : f32 to vector<4x128xf32>
      %613 = arith.select %608, %611, %612 : vector<4x128xi1>, vector<4x128xf32>
      %614 = arith.addf %601, %613 : vector<4x128xf32>
      %c5_365 = arith.constant 5 : index
      %c0_366 = arith.constant 0 : index
      %c0_367 = arith.constant 0 : index
      %615 = vector.load %arg3[%c5_365, %c0_366, %c0_367] : memref<8x4x128xi8, #tpu.memory_space<vmem>>, vector<1x4x128xi8>
      %616 = vector.shape_cast %615 : vector<1x4x128xi8> to vector<4x128xi8>
      %617 = arith.extui %616 : vector<4x128xi8> to vector<4x128xi32>
      %c32_i32_368 = arith.constant 32 : i32
      %618 = vector.broadcast %c32_i32_368 : i32 to vector<4x128xi32>
      %619 = arith.andi %617, %618 : vector<4x128xi32>
      %c0_i32_369 = arith.constant 0 : i32
      %620 = vector.broadcast %c0_i32_369 : i32 to vector<4x128xi32>
      %621 = arith.cmpi ne, %619, %620 : vector<4x128xi32>
      %c5_370 = arith.constant 5 : index
      %c0_371 = arith.constant 0 : index
      %622 = vector.load %arg4[%c5_370, %c0_371] : memref<8x128xf32, #tpu.memory_space<vmem>>, vector<1x128xf32>
      %cst_372 = arith.constant 0.000000e+00 : f32
      %623 = vector.shape_cast %622 : vector<1x128xf32> to vector<1x128xf32>
      %624 = vector.broadcast %623 : vector<1x128xf32> to vector<4x128xf32>
      %625 = vector.broadcast %cst_372 : f32 to vector<4x128xf32>
      %626 = arith.select %621, %624, %625 : vector<4x128xi1>, vector<4x128xf32>
      %627 = arith.addf %614, %626 : vector<4x128xf32>
      %c6_373 = arith.constant 6 : index
      %c0_374 = arith.constant 0 : index
      %c0_375 = arith.constant 0 : index
      %628 = vector.load %arg3[%c6_373, %c0_374, %c0_375] : memref<8x4x128xi8, #tpu.memory_space<vmem>>, vector<1x4x128xi8>
      %629 = vector.shape_cast %628 : vector<1x4x128xi8> to vector<4x128xi8>
      %630 = arith.extui %629 : vector<4x128xi8> to vector<4x128xi32>
      %c32_i32_376 = arith.constant 32 : i32
      %631 = vector.broadcast %c32_i32_376 : i32 to vector<4x128xi32>
      %632 = arith.andi %630, %631 : vector<4x128xi32>
      %c0_i32_377 = arith.constant 0 : i32
      %633 = vector.broadcast %c0_i32_377 : i32 to vector<4x128xi32>
      %634 = arith.cmpi ne, %632, %633 : vector<4x128xi32>
      %c6_378 = arith.constant 6 : index
      %c0_379 = arith.constant 0 : index
      %635 = vector.load %arg4[%c6_378, %c0_379] : memref<8x128xf32, #tpu.memory_space<vmem>>, vector<1x128xf32>
      %cst_380 = arith.constant 0.000000e+00 : f32
      %636 = vector.shape_cast %635 : vector<1x128xf32> to vector<1x128xf32>
      %637 = vector.broadcast %636 : vector<1x128xf32> to vector<4x128xf32>
      %638 = vector.broadcast %cst_380 : f32 to vector<4x128xf32>
      %639 = arith.select %634, %637, %638 : vector<4x128xi1>, vector<4x128xf32>
      %640 = arith.addf %627, %639 : vector<4x128xf32>
      %c7_381 = arith.constant 7 : index
      %c0_382 = arith.constant 0 : index
      %c0_383 = arith.constant 0 : index
      %641 = vector.load %arg3[%c7_381, %c0_382, %c0_383] : memref<8x4x128xi8, #tpu.memory_space<vmem>>, vector<1x4x128xi8>
      %642 = vector.shape_cast %641 : vector<1x4x128xi8> to vector<4x128xi8>
      %643 = arith.extui %642 : vector<4x128xi8> to vector<4x128xi32>
      %c32_i32_384 = arith.constant 32 : i32
      %644 = vector.broadcast %c32_i32_384 : i32 to vector<4x128xi32>
      %645 = arith.andi %643, %644 : vector<4x128xi32>
      %c0_i32_385 = arith.constant 0 : i32
      %646 = vector.broadcast %c0_i32_385 : i32 to vector<4x128xi32>
      %647 = arith.cmpi ne, %645, %646 : vector<4x128xi32>
      %c7_386 = arith.constant 7 : index
      %c0_387 = arith.constant 0 : index
      %648 = vector.load %arg4[%c7_386, %c0_387] : memref<8x128xf32, #tpu.memory_space<vmem>>, vector<1x128xf32>
      %cst_388 = arith.constant 0.000000e+00 : f32
      %649 = vector.shape_cast %648 : vector<1x128xf32> to vector<1x128xf32>
      %650 = vector.broadcast %649 : vector<1x128xf32> to vector<4x128xf32>
      %651 = vector.broadcast %cst_388 : f32 to vector<4x128xf32>
      %652 = arith.select %647, %650, %651 : vector<4x128xi1>, vector<4x128xf32>
      %653 = arith.addf %640, %652 : vector<4x128xf32>
      %c20 = arith.constant 20 : index
      %c0_389 = arith.constant 0 : index
      %654 = vector.load %arg8[%c20, %c0_389] : memref<32x128xf32, #tpu.memory_space<vmem>>, vector<4x128xf32>
      tpu.vector_store %arg8[%c20, %c0_389], %653 {strides = array<i32>} : memref<32x128xf32, #tpu.memory_space<vmem>>, vector<4x128xf32>,
      %655 = vector.shape_cast %12 : vector<1x128xf32> to vector<1x128xf32>
      %656 = vector.broadcast %655 : vector<1x128xf32> to vector<4x128xf32>
      %c0_390 = arith.constant 0 : index
      %c0_391 = arith.constant 0 : index
      %c0_392 = arith.constant 0 : index
      %657 = vector.load %arg3[%c0_390, %c0_391, %c0_392] : memref<8x4x128xi8, #tpu.memory_space<vmem>>, vector<1x4x128xi8>
      %658 = vector.shape_cast %657 : vector<1x4x128xi8> to vector<4x128xi8>
      %659 = arith.extui %658 : vector<4x128xi8> to vector<4x128xi32>
      %c64_i32 = arith.constant 64 : i32
      %660 = vector.broadcast %c64_i32 : i32 to vector<4x128xi32>
      %661 = arith.andi %659, %660 : vector<4x128xi32>
      %c0_i32_393 = arith.constant 0 : i32
      %662 = vector.broadcast %c0_i32_393 : i32 to vector<4x128xi32>
      %663 = arith.cmpi ne, %661, %662 : vector<4x128xi32>
      %c0_394 = arith.constant 0 : index
      %c0_395 = arith.constant 0 : index
      %664 = vector.load %arg4[%c0_394, %c0_395] : memref<8x128xf32, #tpu.memory_space<vmem>>, vector<1x128xf32>
      %cst_396 = arith.constant 0.000000e+00 : f32
      %665 = vector.shape_cast %664 : vector<1x128xf32> to vector<1x128xf32>
      %666 = vector.broadcast %665 : vector<1x128xf32> to vector<4x128xf32>
      %667 = vector.broadcast %cst_396 : f32 to vector<4x128xf32>
      %668 = arith.select %663, %666, %667 : vector<4x128xi1>, vector<4x128xf32>
      %669 = arith.addf %656, %668 : vector<4x128xf32>
      %c1_397 = arith.constant 1 : index
      %c0_398 = arith.constant 0 : index
      %c0_399 = arith.constant 0 : index
      %670 = vector.load %arg3[%c1_397, %c0_398, %c0_399] : memref<8x4x128xi8, #tpu.memory_space<vmem>>, vector<1x4x128xi8>
      %671 = vector.shape_cast %670 : vector<1x4x128xi8> to vector<4x128xi8>
      %672 = arith.extui %671 : vector<4x128xi8> to vector<4x128xi32>
      %c64_i32_400 = arith.constant 64 : i32
      %673 = vector.broadcast %c64_i32_400 : i32 to vector<4x128xi32>
      %674 = arith.andi %672, %673 : vector<4x128xi32>
      %c0_i32_401 = arith.constant 0 : i32
      %675 = vector.broadcast %c0_i32_401 : i32 to vector<4x128xi32>
      %676 = arith.cmpi ne, %674, %675 : vector<4x128xi32>
      %c1_402 = arith.constant 1 : index
      %c0_403 = arith.constant 0 : index
      %677 = vector.load %arg4[%c1_402, %c0_403] : memref<8x128xf32, #tpu.memory_space<vmem>>, vector<1x128xf32>
      %cst_404 = arith.constant 0.000000e+00 : f32
      %678 = vector.shape_cast %677 : vector<1x128xf32> to vector<1x128xf32>
      %679 = vector.broadcast %678 : vector<1x128xf32> to vector<4x128xf32>
      %680 = vector.broadcast %cst_404 : f32 to vector<4x128xf32>
      %681 = arith.select %676, %679, %680 : vector<4x128xi1>, vector<4x128xf32>
      %682 = arith.addf %669, %681 : vector<4x128xf32>
      %c2_405 = arith.constant 2 : index
      %c0_406 = arith.constant 0 : index
      %c0_407 = arith.constant 0 : index
      %683 = vector.load %arg3[%c2_405, %c0_406, %c0_407] : memref<8x4x128xi8, #tpu.memory_space<vmem>>, vector<1x4x128xi8>
      %684 = vector.shape_cast %683 : vector<1x4x128xi8> to vector<4x128xi8>
      %685 = arith.extui %684 : vector<4x128xi8> to vector<4x128xi32>
      %c64_i32_408 = arith.constant 64 : i32
      %686 = vector.broadcast %c64_i32_408 : i32 to vector<4x128xi32>
      %687 = arith.andi %685, %686 : vector<4x128xi32>
      %c0_i32_409 = arith.constant 0 : i32
      %688 = vector.broadcast %c0_i32_409 : i32 to vector<4x128xi32>
      %689 = arith.cmpi ne, %687, %688 : vector<4x128xi32>
      %c2_410 = arith.constant 2 : index
      %c0_411 = arith.constant 0 : index
      %690 = vector.load %arg4[%c2_410, %c0_411] : memref<8x128xf32, #tpu.memory_space<vmem>>, vector<1x128xf32>
      %cst_412 = arith.constant 0.000000e+00 : f32
      %691 = vector.shape_cast %690 : vector<1x128xf32> to vector<1x128xf32>
      %692 = vector.broadcast %691 : vector<1x128xf32> to vector<4x128xf32>
      %693 = vector.broadcast %cst_412 : f32 to vector<4x128xf32>
      %694 = arith.select %689, %692, %693 : vector<4x128xi1>, vector<4x128xf32>
      %695 = arith.addf %682, %694 : vector<4x128xf32>
      %c3_413 = arith.constant 3 : index
      %c0_414 = arith.constant 0 : index
      %c0_415 = arith.constant 0 : index
      %696 = vector.load %arg3[%c3_413, %c0_414, %c0_415] : memref<8x4x128xi8, #tpu.memory_space<vmem>>, vector<1x4x128xi8>
      %697 = vector.shape_cast %696 : vector<1x4x128xi8> to vector<4x128xi8>
      %698 = arith.extui %697 : vector<4x128xi8> to vector<4x128xi32>
      %c64_i32_416 = arith.constant 64 : i32
      %699 = vector.broadcast %c64_i32_416 : i32 to vector<4x128xi32>
      %700 = arith.andi %698, %699 : vector<4x128xi32>
      %c0_i32_417 = arith.constant 0 : i32
      %701 = vector.broadcast %c0_i32_417 : i32 to vector<4x128xi32>
      %702 = arith.cmpi ne, %700, %701 : vector<4x128xi32>
      %c3_418 = arith.constant 3 : index
      %c0_419 = arith.constant 0 : index
      %703 = vector.load %arg4[%c3_418, %c0_419] : memref<8x128xf32, #tpu.memory_space<vmem>>, vector<1x128xf32>
      %cst_420 = arith.constant 0.000000e+00 : f32
      %704 = vector.shape_cast %703 : vector<1x128xf32> to vector<1x128xf32>
      %705 = vector.broadcast %704 : vector<1x128xf32> to vector<4x128xf32>
      %706 = vector.broadcast %cst_420 : f32 to vector<4x128xf32>
      %707 = arith.select %702, %705, %706 : vector<4x128xi1>, vector<4x128xf32>
      %708 = arith.addf %695, %707 : vector<4x128xf32>
      %c4_421 = arith.constant 4 : index
      %c0_422 = arith.constant 0 : index
      %c0_423 = arith.constant 0 : index
      %709 = vector.load %arg3[%c4_421, %c0_422, %c0_423] : memref<8x4x128xi8, #tpu.memory_space<vmem>>, vector<1x4x128xi8>
      %710 = vector.shape_cast %709 : vector<1x4x128xi8> to vector<4x128xi8>
      %711 = arith.extui %710 : vector<4x128xi8> to vector<4x128xi32>
      %c64_i32_424 = arith.constant 64 : i32
      %712 = vector.broadcast %c64_i32_424 : i32 to vector<4x128xi32>
      %713 = arith.andi %711, %712 : vector<4x128xi32>
      %c0_i32_425 = arith.constant 0 : i32
      %714 = vector.broadcast %c0_i32_425 : i32 to vector<4x128xi32>
      %715 = arith.cmpi ne, %713, %714 : vector<4x128xi32>
      %c4_426 = arith.constant 4 : index
      %c0_427 = arith.constant 0 : index
      %716 = vector.load %arg4[%c4_426, %c0_427] : memref<8x128xf32, #tpu.memory_space<vmem>>, vector<1x128xf32>
      %cst_428 = arith.constant 0.000000e+00 : f32
      %717 = vector.shape_cast %716 : vector<1x128xf32> to vector<1x128xf32>
      %718 = vector.broadcast %717 : vector<1x128xf32> to vector<4x128xf32>
      %719 = vector.broadcast %cst_428 : f32 to vector<4x128xf32>
      %720 = arith.select %715, %718, %719 : vector<4x128xi1>, vector<4x128xf32>
      %721 = arith.addf %708, %720 : vector<4x128xf32>
      %c5_429 = arith.constant 5 : index
      %c0_430 = arith.constant 0 : index
      %c0_431 = arith.constant 0 : index
      %722 = vector.load %arg3[%c5_429, %c0_430, %c0_431] : memref<8x4x128xi8, #tpu.memory_space<vmem>>, vector<1x4x128xi8>
      %723 = vector.shape_cast %722 : vector<1x4x128xi8> to vector<4x128xi8>
      %724 = arith.extui %723 : vector<4x128xi8> to vector<4x128xi32>
      %c64_i32_432 = arith.constant 64 : i32
      %725 = vector.broadcast %c64_i32_432 : i32 to vector<4x128xi32>
      %726 = arith.andi %724, %725 : vector<4x128xi32>
      %c0_i32_433 = arith.constant 0 : i32
      %727 = vector.broadcast %c0_i32_433 : i32 to vector<4x128xi32>
      %728 = arith.cmpi ne, %726, %727 : vector<4x128xi32>
      %c5_434 = arith.constant 5 : index
      %c0_435 = arith.constant 0 : index
      %729 = vector.load %arg4[%c5_434, %c0_435] : memref<8x128xf32, #tpu.memory_space<vmem>>, vector<1x128xf32>
      %cst_436 = arith.constant 0.000000e+00 : f32
      %730 = vector.shape_cast %729 : vector<1x128xf32> to vector<1x128xf32>
      %731 = vector.broadcast %730 : vector<1x128xf32> to vector<4x128xf32>
      %732 = vector.broadcast %cst_436 : f32 to vector<4x128xf32>
      %733 = arith.select %728, %731, %732 : vector<4x128xi1>, vector<4x128xf32>
      %734 = arith.addf %721, %733 : vector<4x128xf32>
      %c6_437 = arith.constant 6 : index
      %c0_438 = arith.constant 0 : index
      %c0_439 = arith.constant 0 : index
      %735 = vector.load %arg3[%c6_437, %c0_438, %c0_439] : memref<8x4x128xi8, #tpu.memory_space<vmem>>, vector<1x4x128xi8>
      %736 = vector.shape_cast %735 : vector<1x4x128xi8> to vector<4x128xi8>
      %737 = arith.extui %736 : vector<4x128xi8> to vector<4x128xi32>
      %c64_i32_440 = arith.constant 64 : i32
      %738 = vector.broadcast %c64_i32_440 : i32 to vector<4x128xi32>
      %739 = arith.andi %737, %738 : vector<4x128xi32>
      %c0_i32_441 = arith.constant 0 : i32
      %740 = vector.broadcast %c0_i32_441 : i32 to vector<4x128xi32>
      %741 = arith.cmpi ne, %739, %740 : vector<4x128xi32>
      %c6_442 = arith.constant 6 : index
      %c0_443 = arith.constant 0 : index
      %742 = vector.load %arg4[%c6_442, %c0_443] : memref<8x128xf32, #tpu.memory_space<vmem>>, vector<1x128xf32>
      %cst_444 = arith.constant 0.000000e+00 : f32
      %743 = vector.shape_cast %742 : vector<1x128xf32> to vector<1x128xf32>
      %744 = vector.broadcast %743 : vector<1x128xf32> to vector<4x128xf32>
      %745 = vector.broadcast %cst_444 : f32 to vector<4x128xf32>
      %746 = arith.select %741, %744, %745 : vector<4x128xi1>, vector<4x128xf32>
      %747 = arith.addf %734, %746 : vector<4x128xf32>
      %c7_445 = arith.constant 7 : index
      %c0_446 = arith.constant 0 : index
      %c0_447 = arith.constant 0 : index
      %748 = vector.load %arg3[%c7_445, %c0_446, %c0_447] : memref<8x4x128xi8, #tpu.memory_space<vmem>>, vector<1x4x128xi8>
      %749 = vector.shape_cast %748 : vector<1x4x128xi8> to vector<4x128xi8>
      %750 = arith.extui %749 : vector<4x128xi8> to vector<4x128xi32>
      %c64_i32_448 = arith.constant 64 : i32
      %751 = vector.broadcast %c64_i32_448 : i32 to vector<4x128xi32>
      %752 = arith.andi %750, %751 : vector<4x128xi32>
      %c0_i32_449 = arith.constant 0 : i32
      %753 = vector.broadcast %c0_i32_449 : i32 to vector<4x128xi32>
      %754 = arith.cmpi ne, %752, %753 : vector<4x128xi32>
      %c7_450 = arith.constant 7 : index
      %c0_451 = arith.constant 0 : index
      %755 = vector.load %arg4[%c7_450, %c0_451] : memref<8x128xf32, #tpu.memory_space<vmem>>, vector<1x128xf32>
      %cst_452 = arith.constant 0.000000e+00 : f32
      %756 = vector.shape_cast %755 : vector<1x128xf32> to vector<1x128xf32>
      %757 = vector.broadcast %756 : vector<1x128xf32> to vector<4x128xf32>
      %758 = vector.broadcast %cst_452 : f32 to vector<4x128xf32>
      %759 = arith.select %754, %757, %758 : vector<4x128xi1>, vector<4x128xf32>
      %760 = arith.addf %747, %759 : vector<4x128xf32>
      %c24 = arith.constant 24 : index
      %c0_453 = arith.constant 0 : index
      %761 = vector.load %arg8[%c24, %c0_453] : memref<32x128xf32, #tpu.memory_space<vmem>>, vector<4x128xf32>
      tpu.vector_store %arg8[%c24, %c0_453], %760 {strides = array<i32>} : memref<32x128xf32, #tpu.memory_space<vmem>>, vector<4x128xf32>,
      %762 = vector.shape_cast %12 : vector<1x128xf32> to vector<1x128xf32>
      %763 = vector.broadcast %762 : vector<1x128xf32> to vector<4x128xf32>
      %c0_454 = arith.constant 0 : index
      %c0_455 = arith.constant 0 : index
      %c0_456 = arith.constant 0 : index
      %764 = vector.load %arg3[%c0_454, %c0_455, %c0_456] : memref<8x4x128xi8, #tpu.memory_space<vmem>>, vector<1x4x128xi8>
      %765 = vector.shape_cast %764 : vector<1x4x128xi8> to vector<4x128xi8>
      %766 = arith.extui %765 : vector<4x128xi8> to vector<4x128xi32>
      %c128_i32 = arith.constant 128 : i32
      %767 = vector.broadcast %c128_i32 : i32 to vector<4x128xi32>
      %768 = arith.andi %766, %767 : vector<4x128xi32>
      %c0_i32_457 = arith.constant 0 : i32
      %769 = vector.broadcast %c0_i32_457 : i32 to vector<4x128xi32>
      %770 = arith.cmpi ne, %768, %769 : vector<4x128xi32>
      %c0_458 = arith.constant 0 : index
      %c0_459 = arith.constant 0 : index
      %771 = vector.load %arg4[%c0_458, %c0_459] : memref<8x128xf32, #tpu.memory_space<vmem>>, vector<1x128xf32>
      %cst_460 = arith.constant 0.000000e+00 : f32
      %772 = vector.shape_cast %771 : vector<1x128xf32> to vector<1x128xf32>
      %773 = vector.broadcast %772 : vector<1x128xf32> to vector<4x128xf32>
      %774 = vector.broadcast %cst_460 : f32 to vector<4x128xf32>
      %775 = arith.select %770, %773, %774 : vector<4x128xi1>, vector<4x128xf32>
      %776 = arith.addf %763, %775 : vector<4x128xf32>
      %c1_461 = arith.constant 1 : index
      %c0_462 = arith.constant 0 : index
      %c0_463 = arith.constant 0 : index
      %777 = vector.load %arg3[%c1_461, %c0_462, %c0_463] : memref<8x4x128xi8, #tpu.memory_space<vmem>>, vector<1x4x128xi8>
      %778 = vector.shape_cast %777 : vector<1x4x128xi8> to vector<4x128xi8>
      %779 = arith.extui %778 : vector<4x128xi8> to vector<4x128xi32>
      %c128_i32_464 = arith.constant 128 : i32
      %780 = vector.broadcast %c128_i32_464 : i32 to vector<4x128xi32>
      %781 = arith.andi %779, %780 : vector<4x128xi32>
      %c0_i32_465 = arith.constant 0 : i32
      %782 = vector.broadcast %c0_i32_465 : i32 to vector<4x128xi32>
      %783 = arith.cmpi ne, %781, %782 : vector<4x128xi32>
      %c1_466 = arith.constant 1 : index
      %c0_467 = arith.constant 0 : index
      %784 = vector.load %arg4[%c1_466, %c0_467] : memref<8x128xf32, #tpu.memory_space<vmem>>, vector<1x128xf32>
      %cst_468 = arith.constant 0.000000e+00 : f32
      %785 = vector.shape_cast %784 : vector<1x128xf32> to vector<1x128xf32>
      %786 = vector.broadcast %785 : vector<1x128xf32> to vector<4x128xf32>
      %787 = vector.broadcast %cst_468 : f32 to vector<4x128xf32>
      %788 = arith.select %783, %786, %787 : vector<4x128xi1>, vector<4x128xf32>
      %789 = arith.addf %776, %788 : vector<4x128xf32>
      %c2_469 = arith.constant 2 : index
      %c0_470 = arith.constant 0 : index
      %c0_471 = arith.constant 0 : index
      %790 = vector.load %arg3[%c2_469, %c0_470, %c0_471] : memref<8x4x128xi8, #tpu.memory_space<vmem>>, vector<1x4x128xi8>
      %791 = vector.shape_cast %790 : vector<1x4x128xi8> to vector<4x128xi8>
      %792 = arith.extui %791 : vector<4x128xi8> to vector<4x128xi32>
      %c128_i32_472 = arith.constant 128 : i32
      %793 = vector.broadcast %c128_i32_472 : i32 to vector<4x128xi32>
      %794 = arith.andi %792, %793 : vector<4x128xi32>
      %c0_i32_473 = arith.constant 0 : i32
      %795 = vector.broadcast %c0_i32_473 : i32 to vector<4x128xi32>
      %796 = arith.cmpi ne, %794, %795 : vector<4x128xi32>
      %c2_474 = arith.constant 2 : index
      %c0_475 = arith.constant 0 : index
      %797 = vector.load %arg4[%c2_474, %c0_475] : memref<8x128xf32, #tpu.memory_space<vmem>>, vector<1x128xf32>
      %cst_476 = arith.constant 0.000000e+00 : f32
      %798 = vector.shape_cast %797 : vector<1x128xf32> to vector<1x128xf32>
      %799 = vector.broadcast %798 : vector<1x128xf32> to vector<4x128xf32>
      %800 = vector.broadcast %cst_476 : f32 to vector<4x128xf32>
      %801 = arith.select %796, %799, %800 : vector<4x128xi1>, vector<4x128xf32>
      %802 = arith.addf %789, %801 : vector<4x128xf32>
      %c3_477 = arith.constant 3 : index
      %c0_478 = arith.constant 0 : index
      %c0_479 = arith.constant 0 : index
      %803 = vector.load %arg3[%c3_477, %c0_478, %c0_479] : memref<8x4x128xi8, #tpu.memory_space<vmem>>, vector<1x4x128xi8>
      %804 = vector.shape_cast %803 : vector<1x4x128xi8> to vector<4x128xi8>
      %805 = arith.extui %804 : vector<4x128xi8> to vector<4x128xi32>
      %c128_i32_480 = arith.constant 128 : i32
      %806 = vector.broadcast %c128_i32_480 : i32 to vector<4x128xi32>
      %807 = arith.andi %805, %806 : vector<4x128xi32>
      %c0_i32_481 = arith.constant 0 : i32
      %808 = vector.broadcast %c0_i32_481 : i32 to vector<4x128xi32>
      %809 = arith.cmpi ne, %807, %808 : vector<4x128xi32>
      %c3_482 = arith.constant 3 : index
      %c0_483 = arith.constant 0 : index
      %810 = vector.load %arg4[%c3_482, %c0_483] : memref<8x128xf32, #tpu.memory_space<vmem>>, vector<1x128xf32>
      %cst_484 = arith.constant 0.000000e+00 : f32
      %811 = vector.shape_cast %810 : vector<1x128xf32> to vector<1x128xf32>
      %812 = vector.broadcast %811 : vector<1x128xf32> to vector<4x128xf32>
      %813 = vector.broadcast %cst_484 : f32 to vector<4x128xf32>
      %814 = arith.select %809, %812, %813 : vector<4x128xi1>, vector<4x128xf32>
      %815 = arith.addf %802, %814 : vector<4x128xf32>
      %c4_485 = arith.constant 4 : index
      %c0_486 = arith.constant 0 : index
      %c0_487 = arith.constant 0 : index
      %816 = vector.load %arg3[%c4_485, %c0_486, %c0_487] : memref<8x4x128xi8, #tpu.memory_space<vmem>>, vector<1x4x128xi8>
      %817 = vector.shape_cast %816 : vector<1x4x128xi8> to vector<4x128xi8>
      %818 = arith.extui %817 : vector<4x128xi8> to vector<4x128xi32>
      %c128_i32_488 = arith.constant 128 : i32
      %819 = vector.broadcast %c128_i32_488 : i32 to vector<4x128xi32>
      %820 = arith.andi %818, %819 : vector<4x128xi32>
      %c0_i32_489 = arith.constant 0 : i32
      %821 = vector.broadcast %c0_i32_489 : i32 to vector<4x128xi32>
      %822 = arith.cmpi ne, %820, %821 : vector<4x128xi32>
      %c4_490 = arith.constant 4 : index
      %c0_491 = arith.constant 0 : index
      %823 = vector.load %arg4[%c4_490, %c0_491] : memref<8x128xf32, #tpu.memory_space<vmem>>, vector<1x128xf32>
      %cst_492 = arith.constant 0.000000e+00 : f32
      %824 = vector.shape_cast %823 : vector<1x128xf32> to vector<1x128xf32>
      %825 = vector.broadcast %824 : vector<1x128xf32> to vector<4x128xf32>
      %826 = vector.broadcast %cst_492 : f32 to vector<4x128xf32>
      %827 = arith.select %822, %825, %826 : vector<4x128xi1>, vector<4x128xf32>
      %828 = arith.addf %815, %827 : vector<4x128xf32>
      %c5_493 = arith.constant 5 : index
      %c0_494 = arith.constant 0 : index
      %c0_495 = arith.constant 0 : index
      %829 = vector.load %arg3[%c5_493, %c0_494, %c0_495] : memref<8x4x128xi8, #tpu.memory_space<vmem>>, vector<1x4x128xi8>
      %830 = vector.shape_cast %829 : vector<1x4x128xi8> to vector<4x128xi8>
      %831 = arith.extui %830 : vector<4x128xi8> to vector<4x128xi32>
      %c128_i32_496 = arith.constant 128 : i32
      %832 = vector.broadcast %c128_i32_496 : i32 to vector<4x128xi32>
      %833 = arith.andi %831, %832 : vector<4x128xi32>
      %c0_i32_497 = arith.constant 0 : i32
      %834 = vector.broadcast %c0_i32_497 : i32 to vector<4x128xi32>
      %835 = arith.cmpi ne, %833, %834 : vector<4x128xi32>
      %c5_498 = arith.constant 5 : index
      %c0_499 = arith.constant 0 : index
      %836 = vector.load %arg4[%c5_498, %c0_499] : memref<8x128xf32, #tpu.memory_space<vmem>>, vector<1x128xf32>
      %cst_500 = arith.constant 0.000000e+00 : f32
      %837 = vector.shape_cast %836 : vector<1x128xf32> to vector<1x128xf32>
      %838 = vector.broadcast %837 : vector<1x128xf32> to vector<4x128xf32>
      %839 = vector.broadcast %cst_500 : f32 to vector<4x128xf32>
      %840 = arith.select %835, %838, %839 : vector<4x128xi1>, vector<4x128xf32>
      %841 = arith.addf %828, %840 : vector<4x128xf32>
      %c6_501 = arith.constant 6 : index
      %c0_502 = arith.constant 0 : index
      %c0_503 = arith.constant 0 : index
      %842 = vector.load %arg3[%c6_501, %c0_502, %c0_503] : memref<8x4x128xi8, #tpu.memory_space<vmem>>, vector<1x4x128xi8>
      %843 = vector.shape_cast %842 : vector<1x4x128xi8> to vector<4x128xi8>
      %844 = arith.extui %843 : vector<4x128xi8> to vector<4x128xi32>
      %c128_i32_504 = arith.constant 128 : i32
      %845 = vector.broadcast %c128_i32_504 : i32 to vector<4x128xi32>
      %846 = arith.andi %844, %845 : vector<4x128xi32>
      %c0_i32_505 = arith.constant 0 : i32
      %847 = vector.broadcast %c0_i32_505 : i32 to vector<4x128xi32>
      %848 = arith.cmpi ne, %846, %847 : vector<4x128xi32>
      %c6_506 = arith.constant 6 : index
      %c0_507 = arith.constant 0 : index
      %849 = vector.load %arg4[%c6_506, %c0_507] : memref<8x128xf32, #tpu.memory_space<vmem>>, vector<1x128xf32>
      %cst_508 = arith.constant 0.000000e+00 : f32
      %850 = vector.shape_cast %849 : vector<1x128xf32> to vector<1x128xf32>
      %851 = vector.broadcast %850 : vector<1x128xf32> to vector<4x128xf32>
      %852 = vector.broadcast %cst_508 : f32 to vector<4x128xf32>
      %853 = arith.select %848, %851, %852 : vector<4x128xi1>, vector<4x128xf32>
      %854 = arith.addf %841, %853 : vector<4x128xf32>
      %c7_509 = arith.constant 7 : index
      %c0_510 = arith.constant 0 : index
      %c0_511 = arith.constant 0 : index
      %855 = vector.load %arg3[%c7_509, %c0_510, %c0_511] : memref<8x4x128xi8, #tpu.memory_space<vmem>>, vector<1x4x128xi8>
      %856 = vector.shape_cast %855 : vector<1x4x128xi8> to vector<4x128xi8>
      %857 = arith.extui %856 : vector<4x128xi8> to vector<4x128xi32>
      %c128_i32_512 = arith.constant 128 : i32
      %858 = vector.broadcast %c128_i32_512 : i32 to vector<4x128xi32>
      %859 = arith.andi %857, %858 : vector<4x128xi32>
      %c0_i32_513 = arith.constant 0 : i32
      %860 = vector.broadcast %c0_i32_513 : i32 to vector<4x128xi32>
      %861 = arith.cmpi ne, %859, %860 : vector<4x128xi32>
      %c7_514 = arith.constant 7 : index
      %c0_515 = arith.constant 0 : index
      %862 = vector.load %arg4[%c7_514, %c0_515] : memref<8x128xf32, #tpu.memory_space<vmem>>, vector<1x128xf32>
      %cst_516 = arith.constant 0.000000e+00 : f32
      %863 = vector.shape_cast %862 : vector<1x128xf32> to vector<1x128xf32>
      %864 = vector.broadcast %863 : vector<1x128xf32> to vector<4x128xf32>
      %865 = vector.broadcast %cst_516 : f32 to vector<4x128xf32>
      %866 = arith.select %861, %864, %865 : vector<4x128xi1>, vector<4x128xf32>
      %867 = arith.addf %854, %866 : vector<4x128xf32>
      %c28 = arith.constant 28 : index
      %c0_517 = arith.constant 0 : index
      %868 = vector.load %arg8[%c28, %c0_517] : memref<32x128xf32, #tpu.memory_space<vmem>>, vector<4x128xf32>
      tpu.vector_store %arg8[%c28, %c0_517], %867 {strides = array<i32>} : memref<32x128xf32, #tpu.memory_space<vmem>>, vector<4x128xf32>,
    } else {
    }
    %c0 = arith.constant 0 : index
    %c0_1 = arith.constant 0 : index
    %3 = vector.load %arg2[%c0, %c0_1] : memref<8x32xf32, #tpu.memory_space<vmem>>, vector<8x32xf32>
    %c0_2 = arith.constant 0 : index
    %c0_3 = arith.constant 0 : index
    %4 = vector.load %arg8[%c0_2, %c0_3] : memref<32x128xf32, #tpu.memory_space<vmem>>, vector<32x128xf32>
    %cst = arith.constant dense<0.000000e+00> : vector<8x128xf32>
    %5 = tpu.matmul %3, %4, %cst {dimension_numbers = #tpu.dot_dimension_numbers<[1], [0], [0], [1], [0, 0, 1, 1], [], []>} : vector<8x32xf32>, vector<32x128xf32>, vector<8x128xf32> -> vector<8x128xf32>
    %c0_4 = arith.constant 0 : index
    %c0_5 = arith.constant 0 : index
    %6 = vector.load %arg6[%c0_4, %c0_5] : memref<1x128xf32, #tpu.memory_space<vmem>>, vector<1x128xf32>
    %7 = vector.broadcast %6 : vector<1x128xf32> to vector<8x128xf32>
    %8 = arith.addf %5, %7 : vector<8x128xf32>
    %c0_6 = arith.constant 0 : index
    %c0_7 = arith.constant 0 : index
    %9 = vector.load %arg7[%c0_6, %c0_7] : memref<8x128xf32, #tpu.memory_space<vmem>>, vector<8x128xf32>
    tpu.vector_store %arg7[%c0_6, %c0_7], %8 {strides = array<i32>} : memref<8x128xf32, #tpu.memory_space<vmem>>, vector<8x128xf32>,
    return
  }
  func.func @transform_0(%arg0: i32, %arg1: i32) -> (i32, i32) {
    %c0_i32 = arith.constant 0 : i32
    %c0_i32_0 = arith.constant 0 : i32
    return %arg1, %c0_i32 : i32, i32
  }
  func.func @transform_1(%arg0: i32, %arg1: i32) -> (i32, i32, i32) {
    %c0_i32 = arith.constant 0 : i32
    %c0_i32_0 = arith.constant 0 : i32
    %c0_i32_1 = arith.constant 0 : i32
    return %c0_i32, %c0_i32_0, %arg0 : i32, i32, i32
  }
  func.func @transform_2(%arg0: i32, %arg1: i32) -> (i32, i32) {
    %c0_i32 = arith.constant 0 : i32
    %c0_i32_0 = arith.constant 0 : i32
    return %c0_i32, %arg0 : i32, i32
  }
  func.func @transform_3(%arg0: i32, %arg1: i32) -> (i32, i32) {
    %c0_i32 = arith.constant 0 : i32
    %c0_i32_0 = arith.constant 0 : i32
    return %c0_i32, %arg0 : i32, i32
  }
  func.func @transform_4(%arg0: i32, %arg1: i32) -> (i32, i32) {
    %c0_i32 = arith.constant 0 : i32
    %c0_i32_0 = arith.constant 0 : i32
    return %c0_i32, %arg0 : i32, i32
  }
  func.func @transform_5(%arg0: i32, %arg1: i32) -> (i32, i32) {
    %c0_i32 = arith.constant 0 : i32
    return %arg1, %arg0 : i32, i32
  }
}

</mosaic_0001>

<llo_original>
// kernel: tpu_custom_call.1
$region0: #{tpu_custom_call.1}
  #allocation0 [shape = 'u32[]', space=smem, size = 0x4, offset = 0x4, fixed_abs, tag = 'smem constant byte address 0x4 - core index']
  #allocation1 [shape = 'u32[144,128]{1,0:T(1,128)}', space=vmem, size = 0x12000, scoped, tag = 'internal scratch']
  #allocation2 [shape = 'f32[32,128]{1,0:T(8,128)}', space=vmem, size = 0x4000, scoped, tag = 'scratch operand']
  %s0 = inlined_call_operand.hbm [shape: f32[16,32], index: 0, kind: input, shape index: {}]
  %s1 = inlined_call_operand.hbm [shape: u8[8,4,256], index: 1, kind: input, shape index: {}]
  %s2 = inlined_call_operand.hbm [shape: f32[8,256], index: 2, kind: input, shape index: {}]
  %s3 = inlined_call_operand.vmem [shape: f32[1,256], index: 3, kind: input, shape index: {}]
  %s4 = inlined_call_operand.vmem [shape: f32[1,256], index: 4, kind: input, shape index: {}]
  %s5 = inlined_call_operand.hbm [shape: f32[16,256], index: 5, kind: output, shape index: {}]
  %s6 = sld [smem:[#allocation0]]
  $region69: #{tpu_custom_call.1} parent=0
    _
  %s8 = ssub.s32 1, %s6
  %s9 = scalar_select 0, %s8, %s6
  $region1: #{tpu_custom_call.1} parent=0
    #allocation3 [shape = 'u8[8192]{0}', space=vmem, size = 0x2000, scoped, tag = 'input window, operand 0']
    #allocation4 [shape = 's32[2]{0}', space=sflag, size = 0x8, scoped, tag = 'scoped memory for tpu_custom_call.1']
    #allocation5 [shape = 's32[2]{0}', space=sflag, size = 0x8, scoped, tag = 'scoped memory for tpu_custom_call.1']
    #allocation6 [shape = 'u8[8192]{0}', space=vmem, size = 0x2000, scoped, tag = 'input window, operand 1']
    #allocation7 [shape = 's32[2]{0}', space=sflag, size = 0x8, scoped, tag = 'scoped memory for tpu_custom_call.1']
    #allocation8 [shape = 'u8[8192]{0}', space=vmem, size = 0x2000, scoped, tag = 'input window, operand 2']
    #allocation9 [shape = 'u8[8192]{0}', space=vmem, size = 0x2000, scoped, tag = 'output window, operand 0']
    %10 = vsyncpa [#allocation4], 0
    %s11 = scalar_lea.sflag [#allocation4], 1
    %12 = vsyncpa %s11, 0
    %13 = vsyncpa [#allocation7], 0
    %s14 = scalar_lea.sflag [#allocation7], 1
    %15 = vsyncpa %s14, 0
    %16 = vsyncpa [#allocation5], 0
    %s17 = scalar_lea.sflag [#allocation5], 1
    %18 = vsyncpa %s17, 0
    loop: start=0, step=1, limit=6
    $region2: #{tpu_custom_call.1} parent=1 // loop_pre_header
      _
    $region3: #{tpu_custom_call.1} parent=1 // loop_header
      %s20 = sphi 0, %s24
      %p21 = scmp.ge.s32.totalorder %s20, 6
      %s27 = sphi 0, %s39
      %s28 = sphi 0, %s35
      %s29 = sphi 0, %s27
      %s30 = sphi 0, %s28
      %s31 = sphi 0, %s29
      %s32 = sphi 0, %s30
      %s42 = sphi 0, %s44
      %s45 = sphi 0, %s42
      %s46 = sphi 0, %s45
      %s62 = sphi 0, %s46
      %s68 = sphi 0, %s70
      %s71 = sphi 0, %s68
      %s72 = sphi 0, %s71
      %s88 = sphi 0, %s72
      %s94 = sphi 0, %s96
      %s97 = sphi 0, %s94
      %s98 = sphi 0, %s97
      %s114 = sphi 0, %s98
      %s120 = sphi 0, %s122
      %s123 = sphi 0, %s120
      %s124 = sphi 0, %s123
      %s140 = sphi 0, %s124
      %s146 = sphi 0, %s148
      %s149 = sphi 0, %s146
      %s150 = sphi 0, %s149
      %s166 = sphi 0, %s150
      %s174 = sphi 0, %s176
      %s177 = sphi 0, %s174
      %s178 = sphi 0, %s177
      %s194 = sphi 0, %s178
    $region4: #{tpu_custom_call.1} parent=1 // loop_header_branch
      %23 = sbr.rel (%p21) target = $region8
    $region5: #{tpu_custom_call.1} parent=1 // loop_body
      %s25 = ssub.s32 %s20, 1
      %s26 = ssub.s32 %s20, 2
      %s33 = sadd.s32 1, %s28
      %p34 = scmp.ge.s32.totalorder %s33, 2
      %s35 = scalar_select %p34, 0, %s33
      %s36 = sadd.s32 1, %s27
      %s37 = scalar_select %p34, %s36, %s27
      %p38 = scmp.ge.s32.totalorder %s37, 2
      %s39 = scalar_select %p38, 0, %s37
      %s40 = ssub.s32 %s28, %s35
      %p41 = scmp.eq.s32.totalorder %s40, 0
      %s43 = sadd.s32 %s42, 1
      %s44 = scalar_select %p41, %s42, %s43
      %p47 = pneg %p41
      %p48 = scmp.eq.s32.totalorder %s20, 3
      %p49 = por %p47, %p48
      %p50 = scmp.ne.s32.totalorder %s42, %s45
      %p51 = scmp.eq.s32.totalorder %s20, 0
      %p52 = por %p50, %p51
      %p53 = scmp.ne.s32.totalorder %s42, %s45
      %p54 = scmp.eq.s32.totalorder %s25, 3
      %p55 = por %p53, %p54
      %p56 = scmp.ne.s32.totalorder %s45, %s46
      %p57 = scmp.eq.s32.totalorder %s25, 0
      %p58 = por %p56, %p57
      %p59 = scmp.ne.s32.totalorder %s45, %s46
      %p60 = scmp.eq.s32.totalorder %s26, 3
      %p61 = por %p59, %p60
      %p63 = scmp.ne.s32.totalorder %s46, %s62
      %p64 = scmp.eq.s32.totalorder %s26, 0
      %p65 = por %p63, %p64
      %s66 = ssub.s32 %s27, %s39
      %p67 = scmp.eq.s32.totalorder %s66, 0
      %s69 = sadd.s32 %s68, 1
      %s70 = scalar_select %p67, %s68, %s69
      %p73 = pneg %p67
      %p74 = scmp.eq.s32.totalorder %s20, 3
      %p75 = por %p73, %p74
      %p76 = scmp.ne.s32.totalorder %s68, %s71
      %p77 = scmp.eq.s32.totalorder %s20, 0
      %p78 = por %p76, %p77
      %p79 = scmp.ne.s32.totalorder %s68, %s71
      %p80 = scmp.eq.s32.totalorder %s25, 3
      %p81 = por %p79, %p80
      %p82 = scmp.ne.s32.totalorder %s71, %s72
      %p83 = scmp.eq.s32.totalorder %s25, 0
      %p84 = por %p82, %p83
      %p85 = scmp.ne.s32.totalorder %s71, %s72
      %p86 = scmp.eq.s32.totalorder %s26, 3
      %p87 = por %p85, %p86
      %p89 = scmp.ne.s32.totalorder %s72, %s88
      %p90 = scmp.eq.s32.totalorder %s26, 0
      %p91 = por %p89, %p90
      %s92 = ssub.s32 %s27, %s39
      %p93 = scmp.eq.s32.totalorder %s92, 0
      %s95 = sadd.s32 %s94, 1
      %s96 = scalar_select %p93, %s94, %s95
      %p99 = pneg %p93
      %p100 = scmp.eq.s32.totalorder %s20, 3
      %p101 = por %p99, %p100
      %p102 = scmp.ne.s32.totalorder %s94, %s97
      %p103 = scmp.eq.s32.totalorder %s20, 0
      %p104 = por %p102, %p103
      %p105 = scmp.ne.s32.totalorder %s94, %s97
      %p106 = scmp.eq.s32.totalorder %s25, 3
      %p107 = por %p105, %p106
      %p108 = scmp.ne.s32.totalorder %s97, %s98
      %p109 = scmp.eq.s32.totalorder %s25, 0
      %p110 = por %p108, %p109
      %p111 = scmp.ne.s32.totalorder %s97, %s98
      %p112 = scmp.eq.s32.totalorder %s26, 3
      %p113 = por %p111, %p112
      %p115 = scmp.ne.s32.totalorder %s98, %s114
      %p116 = scmp.eq.s32.totalorder %s26, 0
      %p117 = por %p115, %p116
      %s118 = ssub.s32 %s27, %s39
      %p119 = scmp.eq.s32.totalorder %s118, 0
      %s121 = sadd.s32 %s120, 1
      %s122 = scalar_select %p119, %s120, %s121
      %p125 = pneg %p119
      %p126 = scmp.eq.s32.totalorder %s20, 3
      %p127 = por %p125, %p126
      %p128 = scmp.ne.s32.totalorder %s120, %s123
      %p129 = scmp.eq.s32.totalorder %s20, 0
      %p130 = por %p128, %p129
      %p131 = scmp.ne.s32.totalorder %s120, %s123
      %p132 = scmp.eq.s32.totalorder %s25, 3
      %p133 = por %p131, %p132
      %p134 = scmp.ne.s32.totalorder %s123, %s124
      %p135 = scmp.eq.s32.totalorder %s25, 0
      %p136 = por %p134, %p135
      %p137 = scmp.ne.s32.totalorder %s123, %s124
      %p138 = scmp.eq.s32.totalorder %s26, 3
      %p139 = por %p137, %p138
      %p141 = scmp.ne.s32.totalorder %s124, %s140
      %p142 = scmp.eq.s32.totalorder %s26, 0
      %p143 = por %p141, %p142
      %s144 = ssub.s32 %s27, %s39
      %p145 = scmp.eq.s32.totalorder %s144, 0
      %s147 = sadd.s32 %s146, 1
      %s148 = scalar_select %p145, %s146, %s147
      %p151 = pneg %p145
      %p152 = scmp.eq.s32.totalorder %s20, 3
      %p153 = por %p151, %p152
      %p154 = scmp.ne.s32.totalorder %s146, %s149
      %p155 = scmp.eq.s32.totalorder %s20, 0
      %p156 = por %p154, %p155
      %p157 = scmp.ne.s32.totalorder %s146, %s149
      %p158 = scmp.eq.s32.totalorder %s25, 3
      %p159 = por %p157, %p158
      %p160 = scmp.ne.s32.totalorder %s149, %s150
      %p161 = scmp.eq.s32.totalorder %s25, 0
      %p162 = por %p160, %p161
      %p163 = scmp.ne.s32.totalorder %s149, %s150
      %p164 = scmp.eq.s32.totalorder %s26, 3
      %p165 = por %p163, %p164
      %p167 = scmp.ne.s32.totalorder %s150, %s166
      %p168 = scmp.eq.s32.totalorder %s26, 0
      %p169 = por %p167, %p168
      %s170 = ssub.s32 %s28, %s35
      %s171 = ssub.s32 %s27, %s39
      %s172 = sor.u32 %s170, %s171
      %p173 = scmp.eq.s32.totalorder %s172, 0
      %s175 = sadd.s32 %s174, 1
      %s176 = scalar_select %p173, %s174, %s175
      %p179 = pneg %p173
      %p180 = scmp.eq.s32.totalorder %s20, 3
      %p181 = por %p179, %p180
      %p182 = scmp.ne.s32.totalorder %s174, %s177
      %p183 = scmp.eq.s32.totalorder %s20, 0
      %p184 = por %p182, %p183
      %p185 = scmp.ne.s32.totalorder %s174, %s177
      %p186 = scmp.eq.s32.totalorder %s25, 3
      %p187 = por %p185, %p186
      %p188 = scmp.ne.s32.totalorder %s177, %s178
      %p189 = scmp.eq.s32.totalorder %s25, 0
      %p190 = por %p188, %p189
      %p191 = scmp.ne.s32.totalorder %s177, %s178
      %p192 = scmp.eq.s32.totalorder %s26, 3
      %p193 = por %p191, %p192
      %p195 = scmp.ne.s32.totalorder %s178, %s194
      %p196 = scmp.eq.s32.totalorder %s26, 0
      %p197 = por %p195, %p196
      %p198 = scmp.le.s32.totalorder 1, %s20
      %p199 = scmp.lt.s32.totalorder %s20, 5
      %p200 = pnand %p198, %p199
      %p201 = pneg %p200
      // Predicated region
      $region9: #{tpu_custom_call.1} parent=5 // pred_check
        _
      $region10: #{tpu_custom_call.1} parent=5 // pred_check_branch
        %203 = sbr.rel (%p200) target = $region12
      $region11: #{tpu_custom_call.1} parent=5 // pred_region
        %s204 = ssub.s32 %s20, 1
      $region12: #{tpu_custom_call.1} parent=5 // pred_fallthru
        _
      %p205 = scmp.lt.s32.totalorder %s20, 4
      // Predicated region
      $region13: #{tpu_custom_call.1} parent=5 // pred_check
        %p206 = pneg %p205
      $region14: #{tpu_custom_call.1} parent=5 // pred_check_branch
        %208 = sbr.rel (%p206) target = $region16
      $region15: #{tpu_custom_call.1} parent=5 // pred_region
        // Predicated region
        $region17: #{tpu_custom_call.1} parent=15 // pred_check
          %p209 = pneg %p52
        $region18: #{tpu_custom_call.1} parent=15 // pred_check_branch
          %211 = sbr.rel (%p209) target = $region20
        $region19: #{tpu_custom_call.1} parent=15 // pred_region
          %s212 = sand.u32 %s42, 1
          %s213 = scalar_lea.sflag [#allocation4], %s212
          %s214 = sand.u32 %s42, 1
          %s215 = smul.addr %s214, 8
          %s216 = scalar_lea.vmem [#allocation3], %s215
          %s218 = ssub.s32 128, 128
          %219 = vsyncadd %s213, %s218
          %s220 = smul.addr %s28, 128
          %s221 = scalar_lea.hbm %s0, %s220
          %s223 = sshll.u32 %s216, 4
          %s224 = int_to_ptr.vmem [resolvable:$true] %s223
          %226 = dma.hbm_to_vmem [thread:$0]  %s221, 128, %s224, %s213
        $region20: #{tpu_custom_call.1} parent=15 // pred_fallthru
          _
        // Predicated region
        $region21: #{tpu_custom_call.1} parent=15 // pred_check
          %p227 = pneg %p78
        $region22: #{tpu_custom_call.1} parent=15 // pred_check_branch
          %229 = sbr.rel (%p227) target = $region24
        $region23: #{tpu_custom_call.1} parent=15 // pred_region
          %s230 = sand.u32 %s20, 1
          %s231 = scalar_lea.sflag [#allocation7], %s230
          %s232 = sand.u32 %s68, 1
          %s233 = smul.addr %s232, 8
          %s234 = scalar_lea.vmem [#allocation6], %s233
          %s236 = ssub.s32 128, 128
          %237 = vsyncadd %s231, %s236
          %s238 = smul.addr %s27, 16
          %s239 = scalar_lea.hbm %s1, %s238
          %s240 = sshll.u32 %s234, 4
          %s241 = int_to_ptr.vmem [resolvable:$true] %s240
          %246 = dma.hbm_to_vmem [thread:$0]  %s239, 128, %s241, %s231, 32, 16, 1
        $region24: #{tpu_custom_call.1} parent=15 // pred_fallthru
          _
        // Predicated region
        $region25: #{tpu_custom_call.1} parent=15 // pred_check
          %p247 = pneg %p104
        $region26: #{tpu_custom_call.1} parent=15 // pred_check_branch
          %249 = sbr.rel (%p247) target = $region28
        $region27: #{tpu_custom_call.1} parent=15 // pred_region
          %s250 = sand.u32 %s20, 1
          %s251 = scalar_lea.sflag [#allocation7], %s250
          %s252 = sand.u32 %s94, 1
          %s253 = smul.addr %s252, 8
          %s254 = scalar_lea.vmem [#allocation8], %s253
          %s256 = ssub.s32 128, 128
          %257 = vsyncadd %s251, %s256
          %s258 = smul.addr %s27, 128
          %s259 = scalar_lea.hbm %s2, %s258
          %s261 = sshll.u32 %s254, 4
          %s262 = int_to_ptr.vmem [resolvable:$true] %s261
          %264 = dma.hbm_to_vmem [thread:$0]  %s259, 128, %s262, %s251
        $region28: #{tpu_custom_call.1} parent=15 // pred_fallthru
          _
        // Predicated region
        $region29: #{tpu_custom_call.1} parent=15 // pred_check
          %p265 = pneg %p130
        $region30: #{tpu_custom_call.1} parent=15 // pred_check_branch
          %267 = sbr.rel (%p265) target = $region32
        $region31: #{tpu_custom_call.1} parent=15 // pred_region
          %p268 = scmp.lt.s32.totalorder %s27, 1
          %s269 = scalar_select %p268, %s27, 1
          %s270 = scalar_lea.vmem %s3, %s269
        $region32: #{tpu_custom_call.1} parent=15 // pred_fallthru
          _
        // Predicated region
        $region33: #{tpu_custom_call.1} parent=15 // pred_check
          %p271 = pneg %p156
        $region34: #{tpu_custom_call.1} parent=15 // pred_check_branch
          %273 = sbr.rel (%p271) target = $region36
        $region35: #{tpu_custom_call.1} parent=15 // pred_region
          %p274 = scmp.lt.s32.totalorder %s27, 1
          %s275 = scalar_select %p274, %s27, 1
          %s276 = scalar_lea.vmem %s4, %s275
        $region36: #{tpu_custom_call.1} parent=15 // pred_fallthru
          _
      $region16: #{tpu_custom_call.1} parent=5 // pred_fallthru
        _
      %p277 = scmp.le.s32.totalorder 1, %s20
      %p278 = scmp.lt.s32.totalorder %s20, 5
      %p279 = pnand %p277, %p278
      %p280 = pneg %p279
      // Predicated region
      $region37: #{tpu_custom_call.1} parent=5 // pred_check
        _
      $region38: #{tpu_custom_call.1} parent=5 // pred_check_branch
        %282 = sbr.rel (%p279) target = $region40
      $region39: #{tpu_custom_call.1} parent=5 // pred_region
        %s283 = ssub.s32 %s20, 1
        %s284 = sand.u32 %s45, 1
        %s285 = scalar_lea.sflag [#allocation4], %s284
        %s286 = sand.u32 %s45, 1
        %s287 = smul.addr %s286, 8
        %s288 = scalar_lea.vmem [#allocation3], %s287
        // Predicated region
        $region41: #{tpu_custom_call.1} parent=39 // pred_check
          %p289 = pneg %p58
        $region42: #{tpu_custom_call.1} parent=39 // pred_check_branch
          %291 = sbr.rel (%p289) target = $region44
        $region43: #{tpu_custom_call.1} parent=39 // pred_region
          %292 = dma.done %s285, 128
        $region44: #{tpu_custom_call.1} parent=39 // pred_fallthru
          _
        %s293 = sand.u32 %s25, 1
        %s294 = scalar_lea.sflag [#allocation7], %s293
        %s295 = sand.u32 %s71, 1
        %s296 = smul.addr %s295, 8
        %s297 = scalar_lea.vmem [#allocation6], %s296
        // Predicated region
        $region45: #{tpu_custom_call.1} parent=39 // pred_check
          %p298 = pneg %p84
        $region46: #{tpu_custom_call.1} parent=39 // pred_check_branch
          %300 = sbr.rel (%p298) target = $region48
        $region47: #{tpu_custom_call.1} parent=39 // pred_region
          %301 = dma.done %s294, 128
        $region48: #{tpu_custom_call.1} parent=39 // pred_fallthru
          _
        %s302 = sand.u32 %s25, 1
        %s303 = scalar_lea.sflag [#allocation7], %s302
        %s304 = sand.u32 %s97, 1
        %s305 = smul.addr %s304, 8
        %s306 = scalar_lea.vmem [#allocation8], %s305
        // Predicated region
        $region49: #{tpu_custom_call.1} parent=39 // pred_check
          %p307 = pneg %p110
        $region50: #{tpu_custom_call.1} parent=39 // pred_check_branch
          %309 = sbr.rel (%p307) target = $region52
        $region51: #{tpu_custom_call.1} parent=39 // pred_region
          %310 = dma.done %s303, 128
        $region52: #{tpu_custom_call.1} parent=39 // pred_fallthru
          _
        %s311 = sand.u32 %s45, 1
        %s312 = scalar_lea.sflag [#allocation4], %s311
        %s313 = sand.u32 %s45, 1
        %s314 = smul.addr %s313, 8
        %s315 = scalar_lea.vmem [#allocation3], %s314
        %p316 = pneg %p58
        %p317 = pneg %p55
        %s318 = sand.u32 %s25, 1
        %s319 = scalar_lea.sflag [#allocation7], %s318
        %s320 = sand.u32 %s71, 1
        %s321 = smul.addr %s320, 8
        %s322 = scalar_lea.vmem [#allocation6], %s321
        %p323 = pneg %p84
        %p324 = pneg %p81
        %s325 = sand.u32 %s25, 1
        %s326 = scalar_lea.sflag [#allocation7], %s325
        %s327 = sand.u32 %s97, 1
        %s328 = smul.addr %s327, 8
        %s329 = scalar_lea.vmem [#allocation8], %s328
        %p330 = pneg %p110
        %p331 = pneg %p107
        %p332 = scmp.lt.s32.totalorder %s29, 1
        %s333 = scalar_select %p332, %s29, 1
        %s334 = scalar_lea.vmem %s3, %s333
        %p335 = pneg %p136
        %p336 = pneg %p133
        %p337 = scmp.lt.s32.totalorder %s29, 1
        %s338 = scalar_select %p337, %s29, 1
        %s339 = scalar_lea.vmem %s4, %s338
        %p340 = pneg %p162
        %p341 = pneg %p159
        %p342 = pneg %p190
        %p343 = pneg %p187
        %s344 = sand.u32 %s177, 1
        %s345 = scalar_lea.sflag [#allocation5], %s344
        %s346 = sand.u32 %s177, 1
        %s347 = smul.addr %s346, 8
        %s348 = scalar_lea.vmem [#allocation9], %s347
        %p349 = scmp.lt.s32.totalorder %s29, 1
        %s350 = scalar_select %p349, %s29, 1
        %s351 = scalar_lea.vmem %s3, %s350
        %p352 = scmp.lt.s32.totalorder %s29, 1
        %s353 = scalar_select %p352, %s29, 1
        %s354 = scalar_lea.vmem %s4, %s353
        %p355 = scmp.eq.s32.totalorder %s30, 0
        // Predicated region
        $region53: #{tpu_custom_call.1} parent=39 // pred_check
          %p356 = pneg %p355
        $region54: #{tpu_custom_call.1} parent=39 // pred_check_branch
          %358 = sbr.rel (%p356) target = $region56
        $region55: #{tpu_custom_call.1} parent=39 // pred_region
          %v359 = vld [vmem:[%s351] sm:$0x1]
          %v360 = vsub.f32 0.0, %v359
          %v362 = vlaneseq
          %v363 = vshrl.u32 %v362, 7
          %v364 = vsub.s32 0, %v363
          %v365 = vrot.slane %v360, %v364
          %v367 = vld [vmem:[%s297] sm:$0x1]
          %v368 = vunpack.c.0.s8 %v367
          %v369 = vand.u32 %v368, 255
          %v370 = vand.u32 %v369, 1
          %vm371 = vcmp.ne.s32.totalorder %v370, 0
          %v372 = vld [vmem:[%s306] sm:$0x1]
          %v373 = vlaneseq
          %v374 = vshrl.u32 %v373, 7
          %v375 = vsub.s32 0, %v374
          %v376 = vrot.slane %v372, %v375
          %v377 = vsel %vm371, %v376, 0.0
          %v378 = vadd.f32 %v365, %v377
          %s379 = scalar_lea.vmem %s297, 1 [#allocation6]
          %v380 = vld [vmem:[%s379] sm:$0x1]
          %v381 = vunpack.c.0.s8 %v380
          %v382 = vand.u32 %v381, 255
          %v383 = vand.u32 %v382, 1
          %vm384 = vcmp.ne.s32.totalorder %v383, 0
          %v385 = vld [vmem:[%s306 + $0x1] sm:$0x1]
          %v386 = vlaneseq
          %v387 = vshrl.u32 %v386, 7
          %v388 = vsub.s32 0, %v387
          %v389 = vrot.slane %v385, %v388
          %v390 = vsel %vm384, %v389, 0.0
          %v391 = vadd.f32 %v378, %v390
          %s392 = scalar_lea.vmem %s297, 2 [#allocation6]
          %v393 = vld [vmem:[%s392] sm:$0x1]
          %v394 = vunpack.c.0.s8 %v393
          %v395 = vand.u32 %v394, 255
          %v396 = vand.u32 %v395, 1
          %vm397 = vcmp.ne.s32.totalorder %v396, 0
          %v398 = vld [vmem:[%s306 + $0x2] sm:$0x1]
          %v399 = vlaneseq
          %v400 = vshrl.u32 %v399, 7
          %v401 = vsub.s32 0, %v400
          %v402 = vrot.slane %v398, %v401
          %v403 = vsel %vm397, %v402, 0.0
          %v404 = vadd.f32 %v391, %v403
          %s405 = scalar_lea.vmem %s297, 3 [#allocation6]
          %v406 = vld [vmem:[%s405] sm:$0x1]
          %v407 = vunpack.c.0.s8 %v406
          %v408 = vand.u32 %v407, 255
          %v409 = vand.u32 %v408, 1
          %vm410 = vcmp.ne.s32.totalorder %v409, 0
          %v411 = vld [vmem:[%s306 + $0x3] sm:$0x1]
          %v412 = vlaneseq
          %v413 = vshrl.u32 %v412, 7
          %v414 = vsub.s32 0, %v413
          %v415 = vrot.slane %v411, %v414
          %v416 = vsel %vm410, %v415, 0.0
          %v417 = vadd.f32 %v404, %v416
          %s418 = scalar_lea.vmem %s297, 4 [#allocation6]
          %v419 = vld [vmem:[%s418] sm:$0x1]
          %v420 = vunpack.c.0.s8 %v419
          %v421 = vand.u32 %v420, 255
          %v422 = vand.u32 %v421, 1
          %vm423 = vcmp.ne.s32.totalorder %v422, 0
          %v424 = vld [vmem:[%s306 + $0x4] sm:$0x1]
          %v425 = vlaneseq
          %v426 = vshrl.u32 %v425, 7
          %v427 = vsub.s32 0, %v426
          %v428 = vrot.slane %v424, %v427
          %v429 = vsel %vm423, %v428, 0.0
          %v430 = vadd.f32 %v417, %v429
          %s431 = scalar_lea.vmem %s297, 5 [#allocation6]
          %v432 = vld [vmem:[%s431] sm:$0x1]
          %v433 = vunpack.c.0.s8 %v432
          %v434 = vand.u32 %v433, 255
          %v435 = vand.u32 %v434, 1
          %vm436 = vcmp.ne.s32.totalorder %v435, 0
          %v437 = vld [vmem:[%s306 + $0x5] sm:$0x1]
          %v438 = vlaneseq
          %v439 = vshrl.u32 %v438, 7
          %v440 = vsub.s32 0, %v439
          %v441 = vrot.slane %v437, %v440
          %v442 = vsel %vm436, %v441, 0.0
          %v443 = vadd.f32 %v430, %v442
          %s444 = scalar_lea.vmem %s297, 6 [#allocation6]
          %v445 = vld [vmem:[%s444] sm:$0x1]
          %v446 = vunpack.c.0.s8 %v445
          %v447 = vand.u32 %v446, 255
          %v448 = vand.u32 %v447, 1
          %vm449 = vcmp.ne.s32.totalorder %v448, 0
          %v450 = vld [vmem:[%s306 + $0x6] sm:$0x1]
          %v451 = vlaneseq
          %v452 = vshrl.u32 %v451, 7
          %v453 = vsub.s32 0, %v452
          %v454 = vrot.slane %v450, %v453
          %v455 = vsel %vm449, %v454, 0.0
          %v456 = vadd.f32 %v443, %v455
          %s457 = scalar_lea.vmem %s297, 7 [#allocation6]
          %v458 = vld [vmem:[%s457] sm:$0x1]
          %v459 = vunpack.c.0.s8 %v458
          %v460 = vand.u32 %v459, 255
          %v461 = vand.u32 %v460, 1
          %vm462 = vcmp.ne.s32.totalorder %v461, 0
          %v463 = vld [vmem:[%s306 + $0x7] sm:$0x1]
          %v464 = vlaneseq
          %v465 = vshrl.u32 %v464, 7
          %v466 = vsub.s32 0, %v465
          %v467 = vrot.slane %v463, %v466
          %v468 = vsel %vm462, %v467, 0.0
          %v469 = vadd.f32 %v456, %v468
          %470 = vst [vmem:[#allocation2] sm:$0xf] %v469
          %v471 = vld [vmem:[%s297] sm:$0x1]
          %v472 = vunpack.c.0.s8 %v471
          %v473 = vand.u32 %v472, 255
          %v474 = vand.u32 %v473, 2
          %vm475 = vcmp.ne.s32.totalorder %v474, 0
          %v476 = vld [vmem:[%s306] sm:$0x1]
          %v477 = vlaneseq
          %v478 = vshrl.u32 %v477, 7
          %v479 = vsub.s32 0, %v478
          %v480 = vrot.slane %v476, %v479
          %v481 = vsel %vm475, %v480, 0.0
          %v482 = vadd.f32 %v365, %v481
          %v483 = vld [vmem:[%s379] sm:$0x1]
          %v484 = vunpack.c.0.s8 %v483
          %v485 = vand.u32 %v484, 255
          %v486 = vand.u32 %v485, 2
          %vm487 = vcmp.ne.s32.totalorder %v486, 0
          %v488 = vld [vmem:[%s306 + $0x1] sm:$0x1]
          %v489 = vlaneseq
          %v490 = vshrl.u32 %v489, 7
          %v491 = vsub.s32 0, %v490
          %v492 = vrot.slane %v488, %v491
          %v493 = vsel %vm487, %v492, 0.0
          %v494 = vadd.f32 %v482, %v493
          %v495 = vld [vmem:[%s392] sm:$0x1]
          %v496 = vunpack.c.0.s8 %v495
          %v497 = vand.u32 %v496, 255
          %v498 = vand.u32 %v497, 2
          %vm499 = vcmp.ne.s32.totalorder %v498, 0
          %v500 = vld [vmem:[%s306 + $0x2] sm:$0x1]
          %v501 = vlaneseq
          %v502 = vshrl.u32 %v501, 7
          %v503 = vsub.s32 0, %v502
          %v504 = vrot.slane %v500, %v503
          %v505 = vsel %vm499, %v504, 0.0
          %v506 = vadd.f32 %v494, %v505
          %v507 = vld [vmem:[%s405] sm:$0x1]
          %v508 = vunpack.c.0.s8 %v507
          %v509 = vand.u32 %v508, 255
          %v510 = vand.u32 %v509, 2
          %vm511 = vcmp.ne.s32.totalorder %v510, 0
          %v512 = vld [vmem:[%s306 + $0x3] sm:$0x1]
          %v513 = vlaneseq
          %v514 = vshrl.u32 %v513, 7
          %v515 = vsub.s32 0, %v514
          %v516 = vrot.slane %v512, %v515
          %v517 = vsel %vm511, %v516, 0.0
          %v518 = vadd.f32 %v506, %v517
          %v519 = vld [vmem:[%s418] sm:$0x1]
          %v520 = vunpack.c.0.s8 %v519
          %v521 = vand.u32 %v520, 255
          %v522 = vand.u32 %v521, 2
          %vm523 = vcmp.ne.s32.totalorder %v522, 0
          %v524 = vld [vmem:[%s306 + $0x4] sm:$0x1]
          %v525 = vlaneseq
          %v526 = vshrl.u32 %v525, 7
          %v527 = vsub.s32 0, %v526
          %v528 = vrot.slane %v524, %v527
          %v529 = vsel %vm523, %v528, 0.0
          %v530 = vadd.f32 %v518, %v529
          %v531 = vld [vmem:[%s431] sm:$0x1]
          %v532 = vunpack.c.0.s8 %v531
          %v533 = vand.u32 %v532, 255
          %v534 = vand.u32 %v533, 2
          %vm535 = vcmp.ne.s32.totalorder %v534, 0
          %v536 = vld [vmem:[%s306 + $0x5] sm:$0x1]
          %v537 = vlaneseq
          %v538 = vshrl.u32 %v537, 7
          %v539 = vsub.s32 0, %v538
          %v540 = vrot.slane %v536, %v539
          %v541 = vsel %vm535, %v540, 0.0
          %v542 = vadd.f32 %v530, %v541
          %v543 = vld [vmem:[%s444] sm:$0x1]
          %v544 = vunpack.c.0.s8 %v543
          %v545 = vand.u32 %v544, 255
          %v546 = vand.u32 %v545, 2
          %vm547 = vcmp.ne.s32.totalorder %v546, 0
          %v548 = vld [vmem:[%s306 + $0x6] sm:$0x1]
          %v549 = vlaneseq
          %v550 = vshrl.u32 %v549, 7
          %v551 = vsub.s32 0, %v550
          %v552 = vrot.slane %v548, %v551
          %v553 = vsel %vm547, %v552, 0.0
          %v554 = vadd.f32 %v542, %v553
          %v555 = vld [vmem:[%s457] sm:$0x1]
          %v556 = vunpack.c.0.s8 %v555
          %v557 = vand.u32 %v556, 255
          %v558 = vand.u32 %v557, 2
          %vm559 = vcmp.ne.s32.totalorder %v558, 0
          %v560 = vld [vmem:[%s306 + $0x7] sm:$0x1]
          %v561 = vlaneseq
          %v562 = vshrl.u32 %v561, 7
          %v563 = vsub.s32 0, %v562
          %v564 = vrot.slane %v560, %v563
          %v565 = vsel %vm559, %v564, 0.0
          %v566 = vadd.f32 %v554, %v565
          %567 = vst [vmem:[#allocation2 + $0x4] sm:$0xf] %v566
          %v568 = vld [vmem:[%s297] sm:$0x1]
          %v569 = vunpack.c.0.s8 %v568
          %v570 = vand.u32 %v569, 255
          %v571 = vand.u32 %v570, 4
          %vm572 = vcmp.ne.s32.totalorder %v571, 0
          %v573 = vld [vmem:[%s306] sm:$0x1]
          %v574 = vlaneseq
          %v575 = vshrl.u32 %v574, 7
          %v576 = vsub.s32 0, %v575
          %v577 = vrot.slane %v573, %v576
          %v578 = vsel %vm572, %v577, 0.0
          %v579 = vadd.f32 %v365, %v578
          %v580 = vld [vmem:[%s379] sm:$0x1]
          %v581 = vunpack.c.0.s8 %v580
          %v582 = vand.u32 %v581, 255
          %v583 = vand.u32 %v582, 4
          %vm584 = vcmp.ne.s32.totalorder %v583, 0
          %v585 = vld [vmem:[%s306 + $0x1] sm:$0x1]
          %v586 = vlaneseq
          %v587 = vshrl.u32 %v586, 7
          %v588 = vsub.s32 0, %v587
          %v589 = vrot.slane %v585, %v588
          %v590 = vsel %vm584, %v589, 0.0
          %v591 = vadd.f32 %v579, %v590
          %v592 = vld [vmem:[%s392] sm:$0x1]
          %v593 = vunpack.c.0.s8 %v592
          %v594 = vand.u32 %v593, 255
          %v595 = vand.u32 %v594, 4
          %vm596 = vcmp.ne.s32.totalorder %v595, 0
          %v597 = vld [vmem:[%s306 + $0x2] sm:$0x1]
          %v598 = vlaneseq
          %v599 = vshrl.u32 %v598, 7
          %v600 = vsub.s32 0, %v599
          %v601 = vrot.slane %v597, %v600
          %v602 = vsel %vm596, %v601, 0.0
          %v603 = vadd.f32 %v591, %v602
          %v604 = vld [vmem:[%s405] sm:$0x1]
          %v605 = vunpack.c.0.s8 %v604
          %v606 = vand.u32 %v605, 255
          %v607 = vand.u32 %v606, 4
          %vm608 = vcmp.ne.s32.totalorder %v607, 0
          %v609 = vld [vmem:[%s306 + $0x3] sm:$0x1]
          %v610 = vlaneseq
          %v611 = vshrl.u32 %v610, 7
          %v612 = vsub.s32 0, %v611
          %v613 = vrot.slane %v609, %v612
          %v614 = vsel %vm608, %v613, 0.0
          %v615 = vadd.f32 %v603, %v614
          %v616 = vld [vmem:[%s418] sm:$0x1]
          %v617 = vunpack.c.0.s8 %v616
          %v618 = vand.u32 %v617, 255
          %v619 = vand.u32 %v618, 4
          %vm620 = vcmp.ne.s32.totalorder %v619, 0
          %v621 = vld [vmem:[%s306 + $0x4] sm:$0x1]
          %v622 = vlaneseq
          %v623 = vshrl.u32 %v622, 7
          %v624 = vsub.s32 0, %v623
          %v625 = vrot.slane %v621, %v624
          %v626 = vsel %vm620, %v625, 0.0
          %v627 = vadd.f32 %v615, %v626
          %v628 = vld [vmem:[%s431] sm:$0x1]
          %v629 = vunpack.c.0.s8 %v628
          %v630 = vand.u32 %v629, 255
          %v631 = vand.u32 %v630, 4
          %vm632 = vcmp.ne.s32.totalorder %v631, 0
          %v633 = vld [vmem:[%s306 + $0x5] sm:$0x1]
          %v634 = vlaneseq
          %v635 = vshrl.u32 %v634, 7
          %v636 = vsub.s32 0, %v635
          %v637 = vrot.slane %v633, %v636
          %v638 = vsel %vm632, %v637, 0.0
          %v639 = vadd.f32 %v627, %v638
          %v640 = vld [vmem:[%s444] sm:$0x1]
          %v641 = vunpack.c.0.s8 %v640
          %v642 = vand.u32 %v641, 255
          %v643 = vand.u32 %v642, 4
          %vm644 = vcmp.ne.s32.totalorder %v643, 0
          %v645 = vld [vmem:[%s306 + $0x6] sm:$0x1]
          %v646 = vlaneseq
          %v647 = vshrl.u32 %v646, 7
          %v648 = vsub.s32 0, %v647
          %v649 = vrot.slane %v645, %v648
          %v650 = vsel %vm644, %v649, 0.0
          %v651 = vadd.f32 %v639, %v650
          %v652 = vld [vmem:[%s457] sm:$0x1]
          %v653 = vunpack.c.0.s8 %v652
          %v654 = vand.u32 %v653, 255
          %v655 = vand.u32 %v654, 4
          %vm656 = vcmp.ne.s32.totalorder %v655, 0
          %v657 = vld [vmem:[%s306 + $0x7] sm:$0x1]
          %v658 = vlaneseq
          %v659 = vshrl.u32 %v658, 7
          %v660 = vsub.s32 0, %v659
          %v661 = vrot.slane %v657, %v660
          %v662 = vsel %vm656, %v661, 0.0
          %v663 = vadd.f32 %v651, %v662
          %664 = vst [vmem:[#allocation2 + $0x8] sm:$0xf] %v663
          %v665 = vld [vmem:[%s297] sm:$0x1]
          %v666 = vunpack.c.0.s8 %v665
          %v667 = vand.u32 %v666, 255
          %v668 = vand.u32 %v667, 8
          %vm669 = vcmp.ne.s32.totalorder %v668, 0
          %v670 = vld [vmem:[%s306] sm:$0x1]
          %v671 = vlaneseq
          %v672 = vshrl.u32 %v671, 7
          %v673 = vsub.s32 0, %v672
          %v674 = vrot.slane %v670, %v673
          %v675 = vsel %vm669, %v674, 0.0
          %v676 = vadd.f32 %v365, %v675
          %v677 = vld [vmem:[%s379] sm:$0x1]
          %v678 = vunpack.c.0.s8 %v677
          %v679 = vand.u32 %v678, 255
          %v680 = vand.u32 %v679, 8
          %vm681 = vcmp.ne.s32.totalorder %v680, 0
          %v682 = vld [vmem:[%s306 + $0x1] sm:$0x1]
          %v683 = vlaneseq
          %v684 = vshrl.u32 %v683, 7
          %v685 = vsub.s32 0, %v684
          %v686 = vrot.slane %v682, %v685
          %v687 = vsel %vm681, %v686, 0.0
          %v688 = vadd.f32 %v676, %v687
          %v689 = vld [vmem:[%s392] sm:$0x1]
          %v690 = vunpack.c.0.s8 %v689
          %v691 = vand.u32 %v690, 255
          %v692 = vand.u32 %v691, 8
          %vm693 = vcmp.ne.s32.totalorder %v692, 0
          %v694 = vld [vmem:[%s306 + $0x2] sm:$0x1]
          %v695 = vlaneseq
          %v696 = vshrl.u32 %v695, 7
          %v697 = vsub.s32 0, %v696
          %v698 = vrot.slane %v694, %v697
          %v699 = vsel %vm693, %v698, 0.0
          %v700 = vadd.f32 %v688, %v699
          %v701 = vld [vmem:[%s405] sm:$0x1]
          %v702 = vunpack.c.0.s8 %v701
          %v703 = vand.u32 %v702, 255
          %v704 = vand.u32 %v703, 8
          %vm705 = vcmp.ne.s32.totalorder %v704, 0
          %v706 = vld [vmem:[%s306 + $0x3] sm:$0x1]
          %v707 = vlaneseq
          %v708 = vshrl.u32 %v707, 7
          %v709 = vsub.s32 0, %v708
          %v710 = vrot.slane %v706, %v709
          %v711 = vsel %vm705, %v710, 0.0
          %v712 = vadd.f32 %v700, %v711
          %v713 = vld [vmem:[%s418] sm:$0x1]
          %v714 = vunpack.c.0.s8 %v713
          %v715 = vand.u32 %v714, 255
          %v716 = vand.u32 %v715, 8
          %vm717 = vcmp.ne.s32.totalorder %v716, 0
          %v718 = vld [vmem:[%s306 + $0x4] sm:$0x1]
          %v719 = vlaneseq
          %v720 = vshrl.u32 %v719, 7
          %v721 = vsub.s32 0, %v720
          %v722 = vrot.slane %v718, %v721
          %v723 = vsel %vm717, %v722, 0.0
          %v724 = vadd.f32 %v712, %v723
          %v725 = vld [vmem:[%s431] sm:$0x1]
          %v726 = vunpack.c.0.s8 %v725
          %v727 = vand.u32 %v726, 255
          %v728 = vand.u32 %v727, 8
          %vm729 = vcmp.ne.s32.totalorder %v728, 0
          %v730 = vld [vmem:[%s306 + $0x5] sm:$0x1]
          %v731 = vlaneseq
          %v732 = vshrl.u32 %v731, 7
          %v733 = vsub.s32 0, %v732
          %v734 = vrot.slane %v730, %v733
          %v735 = vsel %vm729, %v734, 0.0
          %v736 = vadd.f32 %v724, %v735
          %v737 = vld [vmem:[%s444] sm:$0x1]
          %v738 = vunpack.c.0.s8 %v737
          %v739 = vand.u32 %v738, 255
          %v740 = vand.u32 %v739, 8
          %vm741 = vcmp.ne.s32.totalorder %v740, 0
          %v742 = vld [vmem:[%s306 + $0x6] sm:$0x1]
          %v743 = vlaneseq
          %v744 = vshrl.u32 %v743, 7
          %v745 = vsub.s32 0, %v744
          %v746 = vrot.slane %v742, %v745
          %v747 = vsel %vm741, %v746, 0.0
          %v748 = vadd.f32 %v736, %v747
          %v749 = vld [vmem:[%s457] sm:$0x1]
          %v750 = vunpack.c.0.s8 %v749
          %v751 = vand.u32 %v750, 255
          %v752 = vand.u32 %v751, 8
          %vm753 = vcmp.ne.s32.totalorder %v752, 0
          %v754 = vld [vmem:[%s306 + $0x7] sm:$0x1]
          %v755 = vlaneseq
          %v756 = vshrl.u32 %v755, 7
          %v757 = vsub.s32 0, %v756
          %v758 = vrot.slane %v754, %v757
          %v759 = vsel %vm753, %v758, 0.0
          %v760 = vadd.f32 %v748, %v759
          %761 = vst [vmem:[#allocation2 + $0xc] sm:$0xf] %v760
          %v762 = vld [vmem:[%s297] sm:$0x1]
          %v763 = vunpack.c.0.s8 %v762
          %v764 = vand.u32 %v763, 255
          %v765 = vand.u32 %v764, 16
          %vm766 = vcmp.ne.s32.totalorder %v765, 0
          %v767 = vld [vmem:[%s306] sm:$0x1]
          %v768 = vlaneseq
          %v769 = vshrl.u32 %v768, 7
          %v770 = vsub.s32 0, %v769
          %v771 = vrot.slane %v767, %v770
          %v772 = vsel %vm766, %v771, 0.0
          %v773 = vadd.f32 %v365, %v772
          %v774 = vld [vmem:[%s379] sm:$0x1]
          %v775 = vunpack.c.0.s8 %v774
          %v776 = vand.u32 %v775, 255
          %v777 = vand.u32 %v776, 16
          %vm778 = vcmp.ne.s32.totalorder %v777, 0
          %v779 = vld [vmem:[%s306 + $0x1] sm:$0x1]
          %v780 = vlaneseq
          %v781 = vshrl.u32 %v780, 7
          %v782 = vsub.s32 0, %v781
          %v783 = vrot.slane %v779, %v782
          %v784 = vsel %vm778, %v783, 0.0
          %v785 = vadd.f32 %v773, %v784
          %v786 = vld [vmem:[%s392] sm:$0x1]
          %v787 = vunpack.c.0.s8 %v786
          %v788 = vand.u32 %v787, 255
          %v789 = vand.u32 %v788, 16
          %vm790 = vcmp.ne.s32.totalorder %v789, 0
          %v791 = vld [vmem:[%s306 + $0x2] sm:$0x1]
          %v792 = vlaneseq
          %v793 = vshrl.u32 %v792, 7
          %v794 = vsub.s32 0, %v793
          %v795 = vrot.slane %v791, %v794
          %v796 = vsel %vm790, %v795, 0.0
          %v797 = vadd.f32 %v785, %v796
          %v798 = vld [vmem:[%s405] sm:$0x1]
          %v799 = vunpack.c.0.s8 %v798
          %v800 = vand.u32 %v799, 255
          %v801 = vand.u32 %v800, 16
          %vm802 = vcmp.ne.s32.totalorder %v801, 0
          %v803 = vld [vmem:[%s306 + $0x3] sm:$0x1]
          %v804 = vlaneseq
          %v805 = vshrl.u32 %v804, 7
          %v806 = vsub.s32 0, %v805
          %v807 = vrot.slane %v803, %v806
          %v808 = vsel %vm802, %v807, 0.0
          %v809 = vadd.f32 %v797, %v808
          %v810 = vld [vmem:[%s418] sm:$0x1]
          %v811 = vunpack.c.0.s8 %v810
          %v812 = vand.u32 %v811, 255
          %v813 = vand.u32 %v812, 16
          %vm814 = vcmp.ne.s32.totalorder %v813, 0
          %v815 = vld [vmem:[%s306 + $0x4] sm:$0x1]
          %v816 = vlaneseq
          %v817 = vshrl.u32 %v816, 7
          %v818 = vsub.s32 0, %v817
          %v819 = vrot.slane %v815, %v818
          %v820 = vsel %vm814, %v819, 0.0
          %v821 = vadd.f32 %v809, %v820
          %v822 = vld [vmem:[%s431] sm:$0x1]
          %v823 = vunpack.c.0.s8 %v822
          %v824 = vand.u32 %v823, 255
          %v825 = vand.u32 %v824, 16
          %vm826 = vcmp.ne.s32.totalorder %v825, 0
          %v827 = vld [vmem:[%s306 + $0x5] sm:$0x1]
          %v828 = vlaneseq
          %v829 = vshrl.u32 %v828, 7
          %v830 = vsub.s32 0, %v829
          %v831 = vrot.slane %v827, %v830
          %v832 = vsel %vm826, %v831, 0.0
          %v833 = vadd.f32 %v821, %v832
          %v834 = vld [vmem:[%s444] sm:$0x1]
          %v835 = vunpack.c.0.s8 %v834
          %v836 = vand.u32 %v835, 255
          %v837 = vand.u32 %v836, 16
          %vm838 = vcmp.ne.s32.totalorder %v837, 0
          %v839 = vld [vmem:[%s306 + $0x6] sm:$0x1]
          %v840 = vlaneseq
          %v841 = vshrl.u32 %v840, 7
          %v842 = vsub.s32 0, %v841
          %v843 = vrot.slane %v839, %v842
          %v844 = vsel %vm838, %v843, 0.0
          %v845 = vadd.f32 %v833, %v844
          %v846 = vld [vmem:[%s457] sm:$0x1]
          %v847 = vunpack.c.0.s8 %v846
          %v848 = vand.u32 %v847, 255
          %v849 = vand.u32 %v848, 16
          %vm850 = vcmp.ne.s32.totalorder %v849, 0
          %v851 = vld [vmem:[%s306 + $0x7] sm:$0x1]
          %v852 = vlaneseq
          %v853 = vshrl.u32 %v852, 7
          %v854 = vsub.s32 0, %v853
          %v855 = vrot.slane %v851, %v854
          %v856 = vsel %vm850, %v855, 0.0
          %v857 = vadd.f32 %v845, %v856
          %858 = vst [vmem:[#allocation2 + $0x10] sm:$0xf] %v857
          %v859 = vld [vmem:[%s297] sm:$0x1]
          %v860 = vunpack.c.0.s8 %v859
          %v861 = vand.u32 %v860, 255
          %v862 = vand.u32 %v861, 32
          %vm863 = vcmp.ne.s32.totalorder %v862, 0
          %v864 = vld [vmem:[%s306] sm:$0x1]
          %v865 = vlaneseq
          %v866 = vshrl.u32 %v865, 7
          %v867 = vsub.s32 0, %v866
          %v868 = vrot.slane %v864, %v867
          %v869 = vsel %vm863, %v868, 0.0
          %v870 = vadd.f32 %v365, %v869
          %v871 = vld [vmem:[%s379] sm:$0x1]
          %v872 = vunpack.c.0.s8 %v871
          %v873 = vand.u32 %v872, 255
          %v874 = vand.u32 %v873, 32
          %vm875 = vcmp.ne.s32.totalorder %v874, 0
          %v876 = vld [vmem:[%s306 + $0x1] sm:$0x1]
          %v877 = vlaneseq
          %v878 = vshrl.u32 %v877, 7
          %v879 = vsub.s32 0, %v878
          %v880 = vrot.slane %v876, %v879
          %v881 = vsel %vm875, %v880, 0.0
          %v882 = vadd.f32 %v870, %v881
          %v883 = vld [vmem:[%s392] sm:$0x1]
          %v884 = vunpack.c.0.s8 %v883
          %v885 = vand.u32 %v884, 255
          %v886 = vand.u32 %v885, 32
          %vm887 = vcmp.ne.s32.totalorder %v886, 0
          %v888 = vld [vmem:[%s306 + $0x2] sm:$0x1]
          %v889 = vlaneseq
          %v890 = vshrl.u32 %v889, 7
          %v891 = vsub.s32 0, %v890
          %v892 = vrot.slane %v888, %v891
          %v893 = vsel %vm887, %v892, 0.0
          %v894 = vadd.f32 %v882, %v893
          %v895 = vld [vmem:[%s405] sm:$0x1]
          %v896 = vunpack.c.0.s8 %v895
          %v897 = vand.u32 %v896, 255
          %v898 = vand.u32 %v897, 32
          %vm899 = vcmp.ne.s32.totalorder %v898, 0
          %v900 = vld [vmem:[%s306 + $0x3] sm:$0x1]
          %v901 = vlaneseq
          %v902 = vshrl.u32 %v901, 7
          %v903 = vsub.s32 0, %v902
          %v904 = vrot.slane %v900, %v903
          %v905 = vsel %vm899, %v904, 0.0
          %v906 = vadd.f32 %v894, %v905
          %v907 = vld [vmem:[%s418] sm:$0x1]
          %v908 = vunpack.c.0.s8 %v907
          %v909 = vand.u32 %v908, 255
          %v910 = vand.u32 %v909, 32
          %vm911 = vcmp.ne.s32.totalorder %v910, 0
          %v912 = vld [vmem:[%s306 + $0x4] sm:$0x1]
          %v913 = vlaneseq
          %v914 = vshrl.u32 %v913, 7
          %v915 = vsub.s32 0, %v914
          %v916 = vrot.slane %v912, %v915
          %v917 = vsel %vm911, %v916, 0.0
          %v918 = vadd.f32 %v906, %v917
          %v919 = vld [vmem:[%s431] sm:$0x1]
          %v920 = vunpack.c.0.s8 %v919
          %v921 = vand.u32 %v920, 255
          %v922 = vand.u32 %v921, 32
          %vm923 = vcmp.ne.s32.totalorder %v922, 0
          %v924 = vld [vmem:[%s306 + $0x5] sm:$0x1]
          %v925 = vlaneseq
          %v926 = vshrl.u32 %v925, 7
          %v927 = vsub.s32 0, %v926
          %v928 = vrot.slane %v924, %v927
          %v929 = vsel %vm923, %v928, 0.0
          %v930 = vadd.f32 %v918, %v929
          %v931 = vld [vmem:[%s444] sm:$0x1]
          %v932 = vunpack.c.0.s8 %v931
          %v933 = vand.u32 %v932, 255
          %v934 = vand.u32 %v933, 32
          %vm935 = vcmp.ne.s32.totalorder %v934, 0
          %v936 = vld [vmem:[%s306 + $0x6] sm:$0x1]
          %v937 = vlaneseq
          %v938 = vshrl.u32 %v937, 7
          %v939 = vsub.s32 0, %v938
          %v940 = vrot.slane %v936, %v939
          %v941 = vsel %vm935, %v940, 0.0
          %v942 = vadd.f32 %v930, %v941
          %v943 = vld [vmem:[%s457] sm:$0x1]
          %v944 = vunpack.c.0.s8 %v943
          %v945 = vand.u32 %v944, 255
          %v946 = vand.u32 %v945, 32
          %vm947 = vcmp.ne.s32.totalorder %v946, 0
          %v948 = vld [vmem:[%s306 + $0x7] sm:$0x1]
          %v949 = vlaneseq
          %v950 = vshrl.u32 %v949, 7
          %v951 = vsub.s32 0, %v950
          %v952 = vrot.slane %v948, %v951
          %v953 = vsel %vm947, %v952, 0.0
          %v954 = vadd.f32 %v942, %v953
          %955 = vst [vmem:[#allocation2 + $0x14] sm:$0xf] %v954
          %v956 = vld [vmem:[%s297] sm:$0x1]
          %v957 = vunpack.c.0.s8 %v956
          %v958 = vand.u32 %v957, 255
          %v959 = vand.u32 %v958, 64
          %vm960 = vcmp.ne.s32.totalorder %v959, 0
          %v961 = vld [vmem:[%s306] sm:$0x1]
          %v962 = vlaneseq
          %v963 = vshrl.u32 %v962, 7
          %v964 = vsub.s32 0, %v963
          %v965 = vrot.slane %v961, %v964
          %v966 = vsel %vm960, %v965, 0.0
          %v967 = vadd.f32 %v365, %v966
          %v968 = vld [vmem:[%s379] sm:$0x1]
          %v969 = vunpack.c.0.s8 %v968
          %v970 = vand.u32 %v969, 255
          %v971 = vand.u32 %v970, 64
          %vm972 = vcmp.ne.s32.totalorder %v971, 0
          %v973 = vld [vmem:[%s306 + $0x1] sm:$0x1]
          %v974 = vlaneseq
          %v975 = vshrl.u32 %v974, 7
          %v976 = vsub.s32 0, %v975
          %v977 = vrot.slane %v973, %v976
          %v978 = vsel %vm972, %v977, 0.0
          %v979 = vadd.f32 %v967, %v978
          %v980 = vld [vmem:[%s392] sm:$0x1]
          %v981 = vunpack.c.0.s8 %v980
          %v982 = vand.u32 %v981, 255
          %v983 = vand.u32 %v982, 64
          %vm984 = vcmp.ne.s32.totalorder %v983, 0
          %v985 = vld [vmem:[%s306 + $0x2] sm:$0x1]
          %v986 = vlaneseq
          %v987 = vshrl.u32 %v986, 7
          %v988 = vsub.s32 0, %v987
          %v989 = vrot.slane %v985, %v988
          %v990 = vsel %vm984, %v989, 0.0
          %v991 = vadd.f32 %v979, %v990
          %v992 = vld [vmem:[%s405] sm:$0x1]
          %v993 = vunpack.c.0.s8 %v992
          %v994 = vand.u32 %v993, 255
          %v995 = vand.u32 %v994, 64
          %vm996 = vcmp.ne.s32.totalorder %v995, 0
          %v997 = vld [vmem:[%s306 + $0x3] sm:$0x1]
          %v998 = vlaneseq
          %v999 = vshrl.u32 %v998, 7
          %v1000 = vsub.s32 0, %v999
          %v1001 = vrot.slane %v997, %v1000
          %v1002 = vsel %vm996, %v1001, 0.0
          %v1003 = vadd.f32 %v991, %v1002
          %v1004 = vld [vmem:[%s418] sm:$0x1]
          %v1005 = vunpack.c.0.s8 %v1004
          %v1006 = vand.u32 %v1005, 255
          %v1007 = vand.u32 %v1006, 64
          %vm1008 = vcmp.ne.s32.totalorder %v1007, 0
          %v1009 = vld [vmem:[%s306 + $0x4] sm:$0x1]
          %v1010 = vlaneseq
          %v1011 = vshrl.u32 %v1010, 7
          %v1012 = vsub.s32 0, %v1011
          %v1013 = vrot.slane %v1009, %v1012
          %v1014 = vsel %vm1008, %v1013, 0.0
          %v1015 = vadd.f32 %v1003, %v1014
          %v1016 = vld [vmem:[%s431] sm:$0x1]
          %v1017 = vunpack.c.0.s8 %v1016
          %v1018 = vand.u32 %v1017, 255
          %v1019 = vand.u32 %v1018, 64
          %vm1020 = vcmp.ne.s32.totalorder %v1019, 0
          %v1021 = vld [vmem:[%s306 + $0x5] sm:$0x1]
          %v1022 = vlaneseq
          %v1023 = vshrl.u32 %v1022, 7
          %v1024 = vsub.s32 0, %v1023
          %v1025 = vrot.slane %v1021, %v1024
          %v1026 = vsel %vm1020, %v1025, 0.0
          %v1027 = vadd.f32 %v1015, %v1026
          %v1028 = vld [vmem:[%s444] sm:$0x1]
          %v1029 = vunpack.c.0.s8 %v1028
          %v1030 = vand.u32 %v1029, 255
          %v1031 = vand.u32 %v1030, 64
          %vm1032 = vcmp.ne.s32.totalorder %v1031, 0
          %v1033 = vld [vmem:[%s306 + $0x6] sm:$0x1]
          %v1034 = vlaneseq
          %v1035 = vshrl.u32 %v1034, 7
          %v1036 = vsub.s32 0, %v1035
          %v1037 = vrot.slane %v1033, %v1036
          %v1038 = vsel %vm1032, %v1037, 0.0
          %v1039 = vadd.f32 %v1027, %v1038
          %v1040 = vld [vmem:[%s457] sm:$0x1]
          %v1041 = vunpack.c.0.s8 %v1040
          %v1042 = vand.u32 %v1041, 255
          %v1043 = vand.u32 %v1042, 64
          %vm1044 = vcmp.ne.s32.totalorder %v1043, 0
          %v1045 = vld [vmem:[%s306 + $0x7] sm:$0x1]
          %v1046 = vlaneseq
          %v1047 = vshrl.u32 %v1046, 7
          %v1048 = vsub.s32 0, %v1047
          %v1049 = vrot.slane %v1045, %v1048
          %v1050 = vsel %vm1044, %v1049, 0.0
          %v1051 = vadd.f32 %v1039, %v1050
          %1052 = vst [vmem:[#allocation2 + $0x18] sm:$0xf] %v1051
          %v1053 = vld [vmem:[%s297] sm:$0x1]
          %v1054 = vunpack.c.0.s8 %v1053
          %v1055 = vand.u32 %v1054, 255
          %v1056 = vand.u32 %v1055, 128
          %vm1057 = vcmp.ne.s32.totalorder %v1056, 0
          %v1058 = vld [vmem:[%s306] sm:$0x1]
          %v1059 = vlaneseq
          %v1060 = vshrl.u32 %v1059, 7
          %v1061 = vsub.s32 0, %v1060
          %v1062 = vrot.slane %v1058, %v1061
          %v1063 = vsel %vm1057, %v1062, 0.0
          %v1064 = vadd.f32 %v365, %v1063
          %v1065 = vld [vmem:[%s379] sm:$0x1]
          %v1066 = vunpack.c.0.s8 %v1065
          %v1067 = vand.u32 %v1066, 255
          %v1068 = vand.u32 %v1067, 128
          %vm1069 = vcmp.ne.s32.totalorder %v1068, 0
          %v1070 = vld [vmem:[%s306 + $0x1] sm:$0x1]
          %v1071 = vlaneseq
          %v1072 = vshrl.u32 %v1071, 7
          %v1073 = vsub.s32 0, %v1072
          %v1074 = vrot.slane %v1070, %v1073
          %v1075 = vsel %vm1069, %v1074, 0.0
          %v1076 = vadd.f32 %v1064, %v1075
          %v1077 = vld [vmem:[%s392] sm:$0x1]
          %v1078 = vunpack.c.0.s8 %v1077
          %v1079 = vand.u32 %v1078, 255
          %v1080 = vand.u32 %v1079, 128
          %vm1081 = vcmp.ne.s32.totalorder %v1080, 0
          %v1082 = vld [vmem:[%s306 + $0x2] sm:$0x1]
          %v1083 = vlaneseq
          %v1084 = vshrl.u32 %v1083, 7
          %v1085 = vsub.s32 0, %v1084
          %v1086 = vrot.slane %v1082, %v1085
          %v1087 = vsel %vm1081, %v1086, 0.0
          %v1088 = vadd.f32 %v1076, %v1087
          %v1089 = vld [vmem:[%s405] sm:$0x1]
          %v1090 = vunpack.c.0.s8 %v1089
          %v1091 = vand.u32 %v1090, 255
          %v1092 = vand.u32 %v1091, 128
          %vm1093 = vcmp.ne.s32.totalorder %v1092, 0
          %v1094 = vld [vmem:[%s306 + $0x3] sm:$0x1]
          %v1095 = vlaneseq
          %v1096 = vshrl.u32 %v1095, 7
          %v1097 = vsub.s32 0, %v1096
          %v1098 = vrot.slane %v1094, %v1097
          %v1099 = vsel %vm1093, %v1098, 0.0
          %v1100 = vadd.f32 %v1088, %v1099
          %v1101 = vld [vmem:[%s418] sm:$0x1]
          %v1102 = vunpack.c.0.s8 %v1101
          %v1103 = vand.u32 %v1102, 255
          %v1104 = vand.u32 %v1103, 128
          %vm1105 = vcmp.ne.s32.totalorder %v1104, 0
          %v1106 = vld [vmem:[%s306 + $0x4] sm:$0x1]
          %v1107 = vlaneseq
          %v1108 = vshrl.u32 %v1107, 7
          %v1109 = vsub.s32 0, %v1108
          %v1110 = vrot.slane %v1106, %v1109
          %v1111 = vsel %vm1105, %v1110, 0.0
          %v1112 = vadd.f32 %v1100, %v1111
          %v1113 = vld [vmem:[%s431] sm:$0x1]
          %v1114 = vunpack.c.0.s8 %v1113
          %v1115 = vand.u32 %v1114, 255
          %v1116 = vand.u32 %v1115, 128
          %vm1117 = vcmp.ne.s32.totalorder %v1116, 0
          %v1118 = vld [vmem:[%s306 + $0x5] sm:$0x1]
          %v1119 = vlaneseq
          %v1120 = vshrl.u32 %v1119, 7
          %v1121 = vsub.s32 0, %v1120
          %v1122 = vrot.slane %v1118, %v1121
          %v1123 = vsel %vm1117, %v1122, 0.0
          %v1124 = vadd.f32 %v1112, %v1123
          %v1125 = vld [vmem:[%s444] sm:$0x1]
          %v1126 = vunpack.c.0.s8 %v1125
          %v1127 = vand.u32 %v1126, 255
          %v1128 = vand.u32 %v1127, 128
          %vm1129 = vcmp.ne.s32.totalorder %v1128, 0
          %v1130 = vld [vmem:[%s306 + $0x6] sm:$0x1]
          %v1131 = vlaneseq
          %v1132 = vshrl.u32 %v1131, 7
          %v1133 = vsub.s32 0, %v1132
          %v1134 = vrot.slane %v1130, %v1133
          %v1135 = vsel %vm1129, %v1134, 0.0
          %v1136 = vadd.f32 %v1124, %v1135
          %v1137 = vld [vmem:[%s457] sm:$0x1]
          %v1138 = vunpack.c.0.s8 %v1137
          %v1139 = vand.u32 %v1138, 255
          %v1140 = vand.u32 %v1139, 128
          %vm1141 = vcmp.ne.s32.totalorder %v1140, 0
          %v1142 = vld [vmem:[%s306 + $0x7] sm:$0x1]
          %v1143 = vlaneseq
          %v1144 = vshrl.u32 %v1143, 7
          %v1145 = vsub.s32 0, %v1144
          %v1146 = vrot.slane %v1142, %v1145
          %v1147 = vsel %vm1141, %v1146, 0.0
          %v1148 = vadd.f32 %v1136, %v1147
          %1149 = vst [vmem:[#allocation2 + $0x1c] sm:$0xf] %v1148
        $region56: #{tpu_custom_call.1} parent=39 // pred_fallthru
          _
        %v1150 = vld [vmem:[%s288] sm:$0xff]
        %v1151 = vld [vmem:[#allocation2] sm:$0xff]
        %v1152 = vld [vmem:[#allocation2 + $0x8] sm:$0xff]
        %v1153 = vld [vmem:[#allocation2 + $0x10] sm:$0xff]
        %v1154 = vld [vmem:[#allocation2 + $0x18] sm:$0xff]
        %v1155 = vld [vmem:[%s354] sm:$0x1]
        %v1157 = vlaneseq
        %v1158 = vshrl.u32 %v1157, 7
        %v1159 = vsub.s32 0, %v1158
        %v1160 = vrot.slane %v1155, %v1159
        %vm1162 = vcmask 261120
        %v1164 = vsel %vm1162, %v1150, 0
        %1166 = vmatprep.subr.mxu0 0.0
        %1167 = vmatpush1.msra.mxu0 %v1151
        %1168 = vmatprep.subr.mxu0 0.0
        %1169 = vmatpush1.msra.mxu0 %v1152
        %1170 = vmatprep.subr.mxu0 0.0
        %1171 = vmatpush1.msra.mxu0 %v1153
        %1172 = vmatprep.subr.mxu0 0.0
        %1173 = vmatpush1.msra.mxu0 %v1154
        %1174 = vmatprep.subr.mxu0 0.0
        %1175 = vmatpush1.msra.mxu0 0.0
        %1176 = vmatprep.subr.mxu0 0.0
        %1177 = vmatpush1.msra.mxu0 0.0
        %1178 = vmatprep.subr.mxu0 0.0
        %1179 = vmatpush1.msra.mxu0 0.0
        %1180 = vmatprep.subr.mxu0 0.0
        %1181 = vmatpush1.msra.mxu0 0.0
        %1182 = vmatprep.subr.mxu0 0.0
        %1183 = vmatpush1.msra.mxu0 0.0
        %1184 = vmatprep.subr.mxu0 0.0
        %1185 = vmatpush1.msra.mxu0 0.0
        %1186 = vmatprep.subr.mxu0 0.0
        %1187 = vmatpush1.msra.mxu0 0.0
        %1188 = vmatprep.subr.mxu0 0.0
        %1189 = vmatpush1.msra.mxu0 0.0
        %1190 = vmatprep.subr.mxu0 0.0
        %1191 = vmatpush1.msra.mxu0 0.0
        %1192 = vmatprep.subr.mxu0 0.0
        %1193 = vmatpush1.msra.mxu0 0.0
        %1194 = vmatprep.subr.mxu0 0.0
        %1195 = vmatpush1.msra.mxu0 0.0
        %1196 = vmatprep.subr.mxu0 0.0
        %1197 = vmatpush1.msra.mxu0 0.0
        %1198 = vmatprep.subr.mxu0 0.0
        %1199 = vmatpush1.msra.mxu0 0.0
        %1200 = vmatprep.subr.mxu0 0.0
        %1201 = vmatpush1.msra.mxu0 0.0
        %1202 = vmatprep.subr.mxu0 0.0
        %1203 = vmatpush1.msra.mxu0 0.0
        %1204 = vmatprep.subr.mxu0 0.0
        %1205 = vmatpush1.msra.mxu0 0.0
        %1206 = vmatprep.subr.mxu0 0.0
        %1207 = vmatpush1.msra.mxu0 0.0
        %1208 = vmatprep.subr.mxu0 0.0
        %1209 = vmatpush1.msra.mxu0 0.0
        %1210 = vmatprep.subr.mxu0 0.0
        %1211 = vmatpush1.msra.mxu0 0.0
        %1212 = vmatprep.subr.mxu0 0.0
        %1213 = vmatpush1.msra.mxu0 0.0
        %1214 = vmatprep.subr.mxu0 0.0
        %1215 = vmatpush1.msra.mxu0 0.0
        %1216 = vmatprep.subr.mxu0 0.0
        %1217 = vmatpush1.msra.mxu0 0.0
        %1218 = vmatprep.subr.mxu0 0.0
        %1219 = vmatpush1.msra.mxu0 0.0
        %1220 = vmatprep.subr.mxu0 0.0
        %1221 = vmatpush1.msra.mxu0 0.0
        %1222 = vmatprep.subr.mxu0 0.0
        %1223 = vmatpush1.msra.mxu0 0.0
        %1224 = vmatprep.subr.mxu0 0.0
        %1225 = vmatpush1.msra.mxu0 0.0
        %1226 = vmatprep.subr.mxu0 0.0
        %1227 = vmatpush1.msra.mxu0 0.0
        %1228 = vmatprep.subr.mxu0 0.0
        %1229 = vmatpush1.msra.mxu0 0.0
        %1230 = vmatprep.mubr.f32.mxu0 0.0
        %1231 = vmatmul.mubr.f32.gmra.mrb[0].mxu0 %v1164
        %v1232 = vpop.f32.mrb[0].mxu0
        %v1233 = vadd.f32 %v1160, %v1232
        %v1234 = vpop.f32.mrb[0].mxu0
        %1235 = vdwg.mxu0
        %1236 = vst [vmem:[%s348] sm:$0xff] %v1233
        %s1237 = sand.u32 %s177, 1
        %s1238 = scalar_lea.sflag [#allocation5], %s1237
        %s1239 = sand.u32 %s177, 1
        %s1240 = smul.addr %s1239, 8
        %s1241 = scalar_lea.vmem [#allocation9], %s1240
        // Predicated region
        $region57: #{tpu_custom_call.1} parent=39 // pred_check
          %p1242 = pneg %p187
        $region58: #{tpu_custom_call.1} parent=39 // pred_check_branch
          %1244 = sbr.rel (%p1242) target = $region60
        $region59: #{tpu_custom_call.1} parent=39 // pred_region
          %s1246 = ssub.s32 128, 128
          %1247 = vsyncadd %s1238, %s1246
          %s1248 = smul.addr %s30, 2
          %s1249 = sadd.s32 %s29, %s1248
          %s1250 = smul.addr %s1249, 128
          %s1251 = scalar_lea.hbm %s5, %s1250
          %s1253 = sshll.u32 %s1241, 4
          %s1254 = int_to_ptr.vmem [resolvable:$true] %s1253
          %1256 = dma.vmem_to_hbm [thread:$0]  %s1254, 128, %s1251, %s1238
        $region60: #{tpu_custom_call.1} parent=39 // pred_fallthru
          _
      $region40: #{tpu_custom_call.1} parent=5 // pred_fallthru
        _
      %p1257 = scmp.le.s32.totalorder 2, %s20
      // Predicated region
      $region61: #{tpu_custom_call.1} parent=5 // pred_check
        %p1258 = pneg %p1257
      $region62: #{tpu_custom_call.1} parent=5 // pred_check_branch
        %1260 = sbr.rel (%p1258) target = $region64
      $region63: #{tpu_custom_call.1} parent=5 // pred_region
        %s1261 = ssub.s32 %s20, 2
        // Predicated region
        $region65: #{tpu_custom_call.1} parent=63 // pred_check
          %p1262 = pneg %p193
        $region66: #{tpu_custom_call.1} parent=63 // pred_check_branch
          %1264 = sbr.rel (%p1262) target = $region68
        $region67: #{tpu_custom_call.1} parent=63 // pred_region
          %s1265 = sand.u32 %s178, 1
          %s1266 = scalar_lea.sflag [#allocation5], %s1265
          %s1267 = sand.u32 %s178, 1
          %s1268 = smul.addr %s1267, 8
          %s1269 = scalar_lea.vmem [#allocation9], %s1268
          %1270 = dma.done %s1266, 128
        $region68: #{tpu_custom_call.1} parent=63 // pred_fallthru
          _
      $region64: #{tpu_custom_call.1} parent=5 // pred_fallthru
        _
    $region6: #{tpu_custom_call.1} parent=1 // loop_footer
      %s24 = sadd.s32 1, %s20
    $region7: #{tpu_custom_call.1} parent=1 // loop_footer_branch
      %19 = sbr.rel target = $region3
    $region8: #{tpu_custom_call.1} parent=1 // loop_exit
      _
    %1271 = vsyncpa [#allocation4], 1
    %s1272 = scalar_lea.sflag [#allocation4], 1
    %1273 = vsyncpa %s1272, 1
    %1274 = vsyncpa [#allocation7], 1
    %s1275 = scalar_lea.sflag [#allocation7], 1
    %1276 = vsyncpa %s1275, 1
    %1277 = vsyncpa [#allocation5], 1
    %s1278 = scalar_lea.sflag [#allocation5], 1
    %1279 = vsyncpa %s1278, 1

</llo_original>
